<compile_context>
chip_gen: v6e
topology: v6e:2x2x1
jax: 0.10.0
libtpu: 0.0.40
codegen_flags: <defaults>
</compile_context>

<pallas_src>
import math

import jax
import jax.numpy as jnp
from jax.experimental import pallas as pl
from jax.experimental.pallas import tpu as pltpu


def _cdiv(a, b):
    return -(-a // b)


# ---------------------------------------------------------------------------
# Kernel
# ---------------------------------------------------------------------------
def _make_decoder_kernel(*, J, CS, IC, Tt, NTc, CF, T, use_halo):
    """J taps/stride groups, CS = C*S output rows, Tt = frame tile,
    NTc = tiles per time chunk, CF = NTc*Tt frames per chunk, T = true length."""

    def kernel(*refs):
        if use_halo:
            w_ref, x_ref, h_ref, o_ref, carry_ref = refs
        else:
            w_ref, x_ref, o_ref, carry_ref = refs
            h_ref = None

        c = pl.program_id(1)              # time chunk            (parallel)
        i = pl.program_id(2)              # tile within the chunk (sequential)
        g = c * NTc + i                   # intended global tile index (pre-clamp)

        # --- load + mask the input tile (x is NOT padded in HBM) -------------
        x = x_ref[...]
        col = g * Tt + jax.lax.broadcasted_iota(jnp.int32, x.shape, 1)
        x = jnp.where(col < T, x, jnp.zeros_like(x))

        # --- one fused MXU matmul: all folded 1x1 convs + all taps + channels
        z = jnp.dot(w_ref[...], x, preferred_element_type=jnp.float32)  # (J*CS, Tt)

        if J == 1:                        # kernel_size <= stride: no overlap
            o_ref[...] = z
            return

        # --- (re)initialize the carry at the first tile of every (b, chunk) --
        @pl.when(i == 0)
        def _():
            if not use_halo:
                carry_ref[...] = jnp.zeros_like(carry_ref)
            else:
                # Recompute the previous chunk's spill from a 128-frame halo
                # block (the frames just before this chunk).  Chunk 0 and any
                # out-of-range frames are masked to zero, so no special cases.
                hx = h_ref[...]                                   # (IC, 128)
                gcol = (c * CF - 128) + jax.lax.broadcasted_iota(
                    jnp.int32, hx.shape, 1)
                hx = jnp.where((gcol >= 0) & (gcol < T), hx, jnp.zeros_like(hx))
                zh = jnp.dot(w_ref[...], hx,
                             preferred_element_type=jnp.float32)  # (J*CS, 128)
                cols = []
                for m in range(J - 1):
                    s = None
                    for j in range(m + 1, J):
                        v = zh[j * CS:(j + 1) * CS, 128 + m - j:128 + m - j + 1]
                        s = v if s is None else s + v
                    cols.append(s)
                carry_ref[...] = (jnp.concatenate(cols, axis=1)
                                  if len(cols) > 1 else cols[0])

        # --- overlap-add of the J tap groups (width stays Tt, no straddling) -
        acc = z[:CS, :]
        for j in range(1, J):
            zj = z[j * CS:(j + 1) * CS, :]
            acc = acc + jnp.concatenate(
                [jnp.zeros((CS, j), jnp.float32), zj[:, :Tt - j]], axis=1)

        # contributions spilling into the next tile's first J-1 frames
        cols = []
        for m in range(J - 1):
            s = None
            for j in range(m + 1, J):
                v = z[j * CS:(j + 1) * CS, Tt + m - j:Tt + m - j + 1]
                s = v if s is None else s + v
            cols.append(s)
        new_carry = jnp.concatenate(cols, axis=1) if len(cols) > 1 else cols[0]

        # Lane-dense full-width store, then a narrow partial-column update that
        # applies the incoming carry to the first J-1 frames of this tile.
        o_ref[...] = acc
        o_ref[:, :J - 1] = acc[:, :J - 1] + carry_ref[...]
        carry_ref[...] = new_carry

    return kernel


# ---------------------------------------------------------------------------
# Wrapper
# ---------------------------------------------------------------------------
def decoder_forward(x, params, *, frame_tile=512, time_chunks=1, mxu_dtype=None):
    """x: (B, C*in_chan, T) -- same layout as the PyTorch module input.

    frame_tile : frames per grid step (rounded to a multiple of 128). The kernel
                 is HBM-bound; sweep 512..2048 for long T.
    time_chunks: >1 splits time into independent parallel chunks (use 2 on v7x
                 when batch==1 so the second TensorCore isn't idle).
    mxu_dtype  : matmul operand dtype; pass jnp.bfloat16 on v5e/v6e/v7x to halve
                 HBM/VMEM traffic for the mem-bound input stream (accumulation
                 stays f32).  Default: keep the input dtype (no extra cast pass).
    """
    K, S, C = params['kernel_size'], params['stride'], params['C']
    B, IC, T = x.shape
    J = _cdiv(K, S)                       # frames overlapped by one input frame
    assert J <= 128, "kernel_size / stride ratio too large for this kernel"
    Kp = J * S                            # taps zero-padded to a stride multiple
    CS = C * S

    # --- fold all bias-free 1x1 convs + all taps into one (J*C*S, IC) matrix --
    w_ct = params['w_ct']                                  # (H, C, K) torch layout
    H = w_ct.shape[0]
    if Kp > K:
        w_ct = jnp.concatenate([w_ct, jnp.zeros((H, C, Kp - K), w_ct.dtype)], axis=2)
    wmat = jnp.transpose(w_ct.reshape(H, C, J, S), (2, 1, 3, 0)).reshape(J * CS, H)
    P = None
    for w1 in params['pointwise']:                         # each (out_c, in_c)
        P = w1 if P is None else jnp.matmul(w1, P, precision=jax.lax.Precision.HIGHEST)
    if P is not None:
        wmat = jnp.matmul(wmat, P, precision=jax.lax.Precision.HIGHEST)

    if mxu_dtype is None:
        mxu_dtype = x.dtype
    wmat = wmat.astype(mxu_dtype)                          # (J*C*S, IC), tiny
    if x.dtype != mxu_dtype:
        # NOTE: in production emit this dtype from the upstream producer; a
        # standalone cast here is an extra HBM pass over the activations.
        x = x.astype(mxu_dtype)

    # --- time tiling: NO full-array pad; tail handled by in-kernel masking ----
    frame_tile = max(128, (frame_tile // 128) * 128)
    if T < 128:
        # tiny inputs only: one-off pad up to a single 128-frame tile
        x = jnp.pad(x, ((0, 0), (0, 0), (0, 128 - T)))
        Tt = 128
    else:
        Tt = min(frame_tile, (T // 128) * 128)
    T_src = x.shape[-1]
    maxblk_x = (T_src - 1) // Tt          # last (at least partially) valid block

    frames_out = T + J - 1                # output frames incl. conv-transpose tail
    NC = max(1, min(time_chunks, _cdiv(frames_out, Tt)))
    NTc = _cdiv(_cdiv(frames_out, NC), Tt)
    CF = NTc * Tt                         # frames per chunk
    TF = NC * CF                          # total (padded) output frames
    use_halo = (NC > 1) and (J > 1)

    kernel = _make_decoder_kernel(J=J, CS=CS, IC=IC, Tt=Tt, NTc=NTc, CF=CF,
                                  T=T, use_halo=use_halo)

    in_specs = [
        # weights: resident, block index constant over the whole grid
        pl.BlockSpec((J * CS, IC), lambda b, c, i: (0, 0)),
        # lane-dense x tile; flush/OOB tiles are clamped here and zero-masked
        # inside the kernel (mandatory since x is unpadded in HBM)
        pl.BlockSpec((None, IC, Tt),
                     lambda b, c, i: (b, 0, jnp.minimum(c * NTc + i, maxblk_x))),
    ]
    args = [wmat, x]
    if use_halo:
        maxblk_h = (T_src - 1) // 128
        in_specs.append(
            pl.BlockSpec((None, IC, 128),
                         lambda b, c, i: (b, 0,
                                          jnp.clip(c * (CF // 128) - 1, 0, maxblk_h))))
        args.append(x)

    out_spec = pl.BlockSpec((None, CS, Tt), lambda b, c, i: (b, 0, c * NTc + i))

    # Explicit VMEM budget (review item): sized from the actual buffers with
    # headroom, floored at 32 MiB and capped at 64 MiB so it also fits v7x.
    isz = jnp.dtype(mxu_dtype).itemsize
    est = (2 * J * CS * IC * isz + 2 * IC * Tt * isz + 2 * CS * Tt * 4
           + (2 * IC * 128 * isz if use_halo else 0)
           + CS * max(J - 1, 1) * 4 + (1 << 20))
    vmem_limit = int(min(max(4 * est, 32 * 1024 * 1024), 64 * 1024 * 1024))

    frames = pl.pallas_call(
        kernel,
        grid=(B, NC, NTc),
        in_specs=in_specs,
        out_specs=out_spec,
        out_shape=jax.ShapeDtypeStruct((B, CS, TF), jnp.float32),
        scratch_shapes=[pltpu.VMEM((CS, max(J - 1, 1)), jnp.float32)],  # tile carry
        compiler_params=pltpu.CompilerParams(
            dimension_semantics=("parallel", "parallel", "arbitrary"),
            vmem_limit_bytes=vmem_limit),
    )(*args)

    # --- un-interleave frames -> (B, C, L_out) --------------------------------
    # TODO(synk): fuse this frame->sample interleave into the kernel store once
    # Mosaic can merge the (C, Tt, S)->(C, Tt*S) minor dims cheaply; it is left
    # to XLA here because it only touches the small C-channel output tensor
    # (the kernel store itself is already lane-dense).
    L_out = (T - 1) * S + K
    out = frames.reshape(B, C, S, TF).transpose(0, 1, 3, 2).reshape(B, C, TF * S)
    return out[:, :, :L_out]


# ---------------------------------------------------------------------------
# Deterministic parameter init (shapes follow the nn.Module __init__)
# ---------------------------------------------------------------------------
def init_decoder_params(key, in_chan, kernel_size, stride, C, layer_num=1):
    IC = C * in_chan
    keys = jax.random.split(key, layer_num + 1)
    ki = 0
    pointwise = []
    cur = IC
    if layer_num - 1:                                  # Conv1d(IC, IC//16, 1, bias=False)
        pointwise.append(jax.random.normal(keys[ki], (IC // 16, IC), jnp.float32)
                         / math.sqrt(IC))
        ki += 1
        cur = IC // 16
    for _ in range(layer_num - 2):                     # Conv1d(cur, cur, 1, bias=False)
        pointwise.append(jax.random.normal(keys[ki], (cur, cur), jnp.float32)
                         / math.sqrt(cur))
        ki += 1
    # ConvTranspose1d(cur, C, kernel_size, stride, bias=False): weight (in, out, K)
    w_ct = (jax.random.normal(keys[ki], (cur, C, kernel_size), jnp.float32)
            / math.sqrt(cur * kernel_size))
    return {'pointwise': pointwise, 'w_ct': w_ct,
            'kernel_size': kernel_size, 'stride': stride, 'C': C}


# ---------------------------------------------------------------------------
# Pure-JAX reference (direct ConvTranspose1d definition) for correctness check
# ---------------------------------------------------------------------------
def decoder_reference(x, params):
    K, S, C = params['kernel_size'], params['stride'], params['C']
    h = x
    for w1 in params['pointwise']:
        h = jnp.einsum('oi,bit->bot', w1, h, precision=jax.lax.Precision.HIGHEST)
    B, _, T = h.shape
    L = (T - 1) * S + K
    y = jnp.einsum('bht,hck->bckt', h, params['w_ct'],
                   precision=jax.lax.Precision.HIGHEST)
    out = jnp.zeros((B, C, L), jnp.float32)
    for k in range(K):
        out = out.at[:, :, k:k + (T - 1) * S + 1:S].add(y[:, :, k, :])
    return out


if __name__ == "__main__":
    key = jax.random.PRNGKey(0)
    k_x, k_p = jax.random.split(key)

    # Decoder(in_chan=64, kernel_size=16, stride=8, C=2, layer_num=2)
    in_chan, kernel_size, stride, C, layer_num = 64, 16, 8, 2, 2
    B, T = 2, 400

    params = init_decoder_params(k_p, in_chan, kernel_size, stride, C, layer_num)
    x = jax.random.normal(k_x, (B, C * in_chan, T), jnp.float32)   # (2, 128, 400)

    L_out = (T - 1) * stride + kernel_size
    ref = decoder_reference(x, params)

    # Default path: big tile, unpadded input, masked tail.
    out = decoder_forward(x, params, frame_tile=512)
    jax.block_until_ready(out)
    assert out.shape == (B, C, L_out), out.shape
    assert out.dtype == jnp.float32
    err = float(jnp.max(jnp.abs(out - ref)))
    assert err < 1e-2, f"max abs error vs reference: {err}"

    # Megacore-style time chunking (v7x 2-TC / small-batch case): same semantics.
    out2 = decoder_forward(x, params, frame_tile=256, time_chunks=2)
    jax.block_until_ready(out2)
    err2 = float(jnp.max(jnp.abs(out2 - ref)))
    assert err2 < 1e-2, f"max abs error (time_chunks=2) vs reference: {err2}"

    print("KERNEL_OK")
</pallas_src>

<mosaic_0001>
module attributes {stable_mosaic.version = 11 : i64} {
  func.func @kernel(%arg0: i32, %arg1: i32, %arg2: i32, %arg3: memref<32x128xf32, #tpu.memory_space<vmem>>, %arg4: memref<1x128x384xf32, #tpu.memory_space<vmem>>, %arg5: memref<1x16x384xf32, #tpu.memory_space<vmem>>, %arg6: memref<16x1xf32, #tpu.memory_space<vmem>>) attributes {dimension_semantics = [#tpu.dimension_semantics<parallel>, #tpu.dimension_semantics<parallel>, #tpu.dimension_semantics<arbitrary>], iteration_bounds = array<i64: 2, 1, 2>, scalar_prefetch = 0 : i64, scratch_operands = 1 : i64, tpu.core_type = #tpu.core_type<tc>, window_params = [{pipeline_mode = #tpu.pipeline_mode<synchronous>, transform_indices = @transform_0, window_bounds = array<i64: 32, 128>}, {transform_indices = @transform_1, window_bounds = array<i64: 1, 128, 384>}, {transform_indices = @transform_2, window_bounds = array<i64: 1, 16, 384>}]} {
    %c2_i32 = arith.constant 2 : i32
    %0 = arith.muli %arg1, %c2_i32 : i32
    %1 = arith.addi %0, %arg2 : i32
    %c0 = arith.constant 0 : index
    %c0_0 = arith.constant 0 : index
    %c0_1 = arith.constant 0 : index
    %2 = vector.load %arg4[%c0, %c0_0, %c0_1] : memref<1x128x384xf32, #tpu.memory_space<vmem>>, vector<1x128x384xf32>
    %3 = vector.shape_cast %2 : vector<1x128x384xf32> to vector<128x384xf32>
    %c384_i32 = arith.constant 384 : i32
    %4 = arith.muli %1, %c384_i32 : i32
    %5 = tpu.iota {dimensions = array<i32: 1>} : vector<128x384xi32>
    %6 = vector.broadcast %4 : i32 to vector<128x384xi32>
    %7 = arith.addi %6, %5 : vector<128x384xi32>
    %c400_i32 = arith.constant 400 : i32
    %8 = vector.broadcast %c400_i32 : i32 to vector<128x384xi32>
    %9 = arith.cmpi slt, %7, %8 : vector<128x384xi32>
    %cst = arith.constant 0.000000e+00 : f32
    %10 = vector.broadcast %cst : f32 to vector<128x384xf32>
    %11 = arith.select %9, %3, %10 : vector<128x384xi1>, vector<128x384xf32>
    %c0_2 = arith.constant 0 : index
    %c0_3 = arith.constant 0 : index
    %12 = vector.load %arg3[%c0_2, %c0_3] : memref<32x128xf32, #tpu.memory_space<vmem>>, vector<32x128xf32>
    %cst_4 = arith.constant dense<0.000000e+00> : vector<32x384xf32>
    %13 = tpu.matmul %12, %11, %cst_4 {dimension_numbers = #tpu.dot_dimension_numbers<[1], [0], [0], [1], [0, 0, 1, 1], [], []>} : vector<32x128xf32>, vector<128x384xf32>, vector<32x384xf32> -> vector<32x384xf32>
    %c0_i32 = arith.constant 0 : i32
    %14 = arith.cmpi eq, %arg2, %c0_i32 : i32
    %15 = arith.extui %14 : i1 to i32
    %c0_i32_5 = arith.constant 0 : i32
    %16 = arith.cmpi ne, %15, %c0_i32_5 : i32
    scf.if %16 {
      %cst_17 = arith.constant 0.000000e+00 : f32
      %34 = vector.broadcast %cst_17 : f32 to vector<16x1xf32>
      %c0_18 = arith.constant 0 : index
      %c0_19 = arith.constant 0 : index
      %35 = vector.load %arg6[%c0_18, %c0_19] : memref<16x1xf32, #tpu.memory_space<vmem>>, vector<16x1xf32>
      tpu.vector_store %arg6[%c0_18, %c0_19], %34 {strides = array<i32>} : memref<16x1xf32, #tpu.memory_space<vmem>>, vector<16x1xf32>,
    } else {
    }
    %17 = vector.extract_strided_slice %13 {offsets = [0, 0], sizes = [16, 384], strides = [1, 1]} : vector<32x384xf32> to vector<16x384xf32>
    %18 = vector.extract_strided_slice %13 {offsets = [16, 0], sizes = [16, 384], strides = [1, 1]} : vector<32x384xf32> to vector<16x384xf32>
    %cst_6 = arith.constant 0.000000e+00 : f32
    %19 = vector.broadcast %cst_6 : f32 to vector<16x1xf32>
    %20 = vector.extract_strided_slice %18 {offsets = [0, 0], sizes = [16, 383], strides = [1, 1]} : vector<16x384xf32> to vector<16x383xf32>
    %21 = tpu.concatenate %19, %20 in 1 : vector<16x1xf32>, vector<16x383xf32> -> vector<16x384xf32>
    %22 = arith.addf %17, %21 : vector<16x384xf32>
    %23 = vector.extract_strided_slice %13 {offsets = [16, 383], sizes = [16, 1], strides = [1, 1]} : vector<32x384xf32> to vector<16x1xf32>
    %c0_7 = arith.constant 0 : index
    %c0_8 = arith.constant 0 : index
    %c0_9 = arith.constant 0 : index
    %24 = vector.load %arg5[%c0_7, %c0_8, %c0_9] : memref<1x16x384xf32, #tpu.memory_space<vmem>>, vector<1x16x384xf32>
    %25 = vector.shape_cast %24 : vector<1x16x384xf32> to vector<16x384xf32>
    %26 = vector.shape_cast %22 : vector<16x384xf32> to vector<1x16x384xf32>
    tpu.vector_store %arg5[%c0_7, %c0_8, %c0_9], %26 {strides = array<i32>} : memref<1x16x384xf32, #tpu.memory_space<vmem>>, vector<1x16x384xf32>,
    %27 = vector.extract_strided_slice %22 {offsets = [0, 0], sizes = [16, 1], strides = [1, 1]} : vector<16x384xf32> to vector<16x1xf32>
    %c0_10 = arith.constant 0 : index
    %c0_11 = arith.constant 0 : index
    %28 = vector.load %arg6[%c0_10, %c0_11] : memref<16x1xf32, #tpu.memory_space<vmem>>, vector<16x1xf32>
    %29 = arith.addf %27, %28 : vector<16x1xf32>
    %c0_12 = arith.constant 0 : index
    %c0_13 = arith.constant 0 : index
    %c0_14 = arith.constant 0 : index
    %30 = vector.load %arg5[%c0_12, %c0_13, %c0_14] : memref<1x16x384xf32, #tpu.memory_space<vmem>>, vector<1x16x1xf32>
    %31 = vector.shape_cast %30 : vector<1x16x1xf32> to vector<16x1xf32>
    %32 = vector.shape_cast %29 : vector<16x1xf32> to vector<1x16x1xf32>
    tpu.vector_store %arg5[%c0_12, %c0_13, %c0_14], %32 {strides = array<i32>} : memref<1x16x384xf32, #tpu.memory_space<vmem>>, vector<1x16x1xf32>,
    %c0_15 = arith.constant 0 : index
    %c0_16 = arith.constant 0 : index
    %33 = vector.load %arg6[%c0_15, %c0_16] : memref<16x1xf32, #tpu.memory_space<vmem>>, vector<16x1xf32>
    tpu.vector_store %arg6[%c0_15, %c0_16], %23 {strides = array<i32>} : memref<16x1xf32, #tpu.memory_space<vmem>>, vector<16x1xf32>,
    return
  }
  func.func @transform_0(%arg0: i32, %arg1: i32, %arg2: i32) -> (i32, i32) {
    %c0_i32 = arith.constant 0 : i32
    %c0_i32_0 = arith.constant 0 : i32
    %c0_i32_1 = arith.constant 0 : i32
    return %c0_i32, %c0_i32_0 : i32, i32
  }
  func.func @transform_1(%arg0: i32, %arg1: i32, %arg2: i32) -> (i32, i32, i32) {
    %c2_i32 = arith.constant 2 : i32
    %0 = arith.muli %arg1, %c2_i32 : i32
    %1 = arith.addi %0, %arg2 : i32
    %c1_i32 = arith.constant 1 : i32
    %2 = arith.minsi %1, %c1_i32 : i32
    %c0_i32 = arith.constant 0 : i32
    %c0_i32_0 = arith.constant 0 : i32
    return %arg0, %c0_i32, %2 : i32, i32, i32
  }
  func.func @transform_2(%arg0: i32, %arg1: i32, %arg2: i32) -> (i32, i32, i32) {
    %c2_i32 = arith.constant 2 : i32
    %0 = arith.muli %arg1, %c2_i32 : i32
    %1 = arith.addi %0, %arg2 : i32
    %c0_i32 = arith.constant 0 : i32
    %c0_i32_0 = arith.constant 0 : i32
    return %arg0, %c0_i32, %1 : i32, i32, i32
  }
}

</mosaic_0001>

<llo_original>
// kernel: tpu_custom_call.1
$region0: #{tpu_custom_call.1}
  #allocation0 [shape = 'u32[]', space=smem, size = 0x4, offset = 0x4, fixed_abs, tag = 'smem constant byte address 0x4 - core index']
  #allocation1 [shape = 'u32[144,128]{1,0:T(1,128)}', space=vmem, size = 0x12000, scoped, tag = 'internal scratch']
  #allocation2 [shape = 'f32[16,1]{1,0:T(8,128)}', space=vmem, size = 0x2000, scoped, tag = 'scratch operand']
  %s0 = inlined_call_operand.vmem [shape: f32[32,128], index: 0, kind: input, shape index: {}]
  %s1 = inlined_call_operand.vmem [shape: f32[2,128,400], index: 1, kind: input, shape index: {}]
  %s2 = inlined_call_operand.hbm [shape: f32[2,16,768], index: 2, kind: output, shape index: {}]
  %s3 = sld [smem:[#allocation0]]
  $region111: #{tpu_custom_call.1} parent=0
    _
  %s5 = ssub.s32 1, %s3
  %s6 = scalar_select 0, %s5, %s3
  $region1: #{tpu_custom_call.1} parent=0
    #allocation3 [shape = 'u8[393216]{0}', space=vmem, size = 0x60000, scoped, tag = 'input window, operand 1']
    #allocation4 [shape = 'u8[49152]{0}', space=vmem, size = 0xc000, scoped, tag = 'output window, operand 0']
    #allocation5 [shape = 's32[2]{0}', space=sflag, size = 0x8, scoped, tag = 'scoped memory for tpu_custom_call.1']
    %7 = vsyncpa [#allocation5], 0
    %s8 = scalar_lea.sflag [#allocation5], 1
    %9 = vsyncpa %s8, 0
    loop: start=0, step=1, limit=6
    $region2: #{tpu_custom_call.1} parent=1 // loop_pre_header
      _
    $region3: #{tpu_custom_call.1} parent=1 // loop_header
      %s11 = sphi 0, %s15
      %p12 = scmp.ge.s32.totalorder %s11, 6
      %s18 = sphi 0, %s37
      %s19 = sphi 0, %s33
      %s20 = sphi 0, %s29
      %s21 = sphi 0, %s18
      %s22 = sphi 0, %s19
      %s23 = sphi 0, %s20
      %s24 = sphi 0, %s21
      %s25 = sphi 0, %s22
      %s26 = sphi 0, %s23
      %s38 = sphi 0, %s38
      %s40 = sphi 0, %s38
      %s41 = sphi 0, %s40
      %s55 = sphi 0, %s41
      %s71 = sphi 0, %s73
      %s74 = sphi 0, %s71
      %s75 = sphi 0, %s74
      %s91 = sphi 0, %s75
      %s103 = sphi 0, %s105
      %s106 = sphi 0, %s103
      %s107 = sphi 0, %s106
      %s123 = sphi 0, %s107
    $region4: #{tpu_custom_call.1} parent=1 // loop_header_branch
      %14 = sbr.rel (%p12) target = $region8
    $region5: #{tpu_custom_call.1} parent=1 // loop_body
      %s16 = ssub.s32 %s11, 1
      %s17 = ssub.s32 %s11, 2
      %s27 = sadd.s32 1, %s20
      %p28 = scmp.ge.s32.totalorder %s27, 2
      %s29 = scalar_select %p28, 0, %s27
      %s30 = sadd.s32 1, %s19
      %s31 = scalar_select %p28, %s30, %s19
      %p32 = scmp.ge.s32.totalorder %s31, 1
      %s33 = scalar_select %p32, 0, %s31
      %s34 = sadd.s32 1, %s18
      %s35 = scalar_select %p32, %s34, %s18
      %p36 = scmp.ge.s32.totalorder %s35, 2
      %s37 = scalar_select %p36, 0, %s35
      %s39 = sadd.s32 %s38, 1
      %p42 = scmp.eq.s32.totalorder %s11, 3
      %p43 = scmp.ne.s32.totalorder %s38, %s40
      %p44 = scmp.eq.s32.totalorder %s11, 0
      %p45 = por %p43, %p44
      %p46 = scmp.ne.s32.totalorder %s38, %s40
      %p47 = scmp.eq.s32.totalorder %s16, 3
      %p48 = por %p46, %p47
      %p49 = scmp.ne.s32.totalorder %s40, %s41
      %p50 = scmp.eq.s32.totalorder %s16, 0
      %p51 = por %p49, %p50
      %p52 = scmp.ne.s32.totalorder %s40, %s41
      %p53 = scmp.eq.s32.totalorder %s17, 3
      %p54 = por %p52, %p53
      %p56 = scmp.ne.s32.totalorder %s41, %s55
      %p57 = scmp.eq.s32.totalorder %s17, 0
      %p58 = por %p56, %p57
      %s59 = smul.u32 %s19, 2
      %s60 = sadd.s32 %s59, %s20
      %p61 = scmp.lt.s32.totalorder %s60, 1
      %s62 = scalar_select %p61, %s60, 1
      %s63 = smul.u32 %s33, 2
      %s64 = sadd.s32 %s63, %s29
      %p65 = scmp.lt.s32.totalorder %s64, 1
      %s66 = scalar_select %p65, %s64, 1
      %s67 = ssub.s32 %s18, %s37
      %s68 = ssub.s32 %s62, %s66
      %s69 = sor.u32 %s67, %s68
      %p70 = scmp.eq.s32.totalorder %s69, 0
      %s72 = sadd.s32 %s71, 1
      %s73 = scalar_select %p70, %s71, %s72
      %p76 = pneg %p70
      %p77 = scmp.eq.s32.totalorder %s11, 3
      %p78 = por %p76, %p77
      %p79 = scmp.ne.s32.totalorder %s71, %s74
      %p80 = scmp.eq.s32.totalorder %s11, 0
      %p81 = por %p79, %p80
      %p82 = scmp.ne.s32.totalorder %s71, %s74
      %p83 = scmp.eq.s32.totalorder %s16, 3
      %p84 = por %p82, %p83
      %p85 = scmp.ne.s32.totalorder %s74, %s75
      %p86 = scmp.eq.s32.totalorder %s16, 0
      %p87 = por %p85, %p86
      %p88 = scmp.ne.s32.totalorder %s74, %s75
      %p89 = scmp.eq.s32.totalorder %s17, 3
      %p90 = por %p88, %p89
      %p92 = scmp.ne.s32.totalorder %s75, %s91
      %p93 = scmp.eq.s32.totalorder %s17, 0
      %p94 = por %p92, %p93
      %s95 = smul.u32 %s19, 2
      %s96 = sadd.s32 %s95, %s20
      %s97 = smul.u32 %s33, 2
      %s98 = sadd.s32 %s97, %s29
      %s99 = ssub.s32 %s18, %s37
      %s100 = ssub.s32 %s96, %s98
      %s101 = sor.u32 %s99, %s100
      %p102 = scmp.eq.s32.totalorder %s101, 0
      %s104 = sadd.s32 %s103, 1
      %s105 = scalar_select %p102, %s103, %s104
      %p108 = pneg %p102
      %p109 = scmp.eq.s32.totalorder %s11, 3
      %p110 = por %p108, %p109
      %p111 = scmp.ne.s32.totalorder %s103, %s106
      %p112 = scmp.eq.s32.totalorder %s11, 0
      %p113 = por %p111, %p112
      %p114 = scmp.ne.s32.totalorder %s103, %s106
      %p115 = scmp.eq.s32.totalorder %s16, 3
      %p116 = por %p114, %p115
      %p117 = scmp.ne.s32.totalorder %s106, %s107
      %p118 = scmp.eq.s32.totalorder %s16, 0
      %p119 = por %p117, %p118
      %p120 = scmp.ne.s32.totalorder %s106, %s107
      %p121 = scmp.eq.s32.totalorder %s17, 3
      %p122 = por %p120, %p121
      %p124 = scmp.ne.s32.totalorder %s107, %s123
      %p125 = scmp.eq.s32.totalorder %s17, 0
      %p126 = por %p124, %p125
      %p127 = scmp.le.s32.totalorder 1, %s11
      %p128 = scmp.lt.s32.totalorder %s11, 5
      %p129 = pnand %p127, %p128
      %p130 = pneg %p129
      // Predicated region
      $region9: #{tpu_custom_call.1} parent=5 // pred_check
        _
      $region10: #{tpu_custom_call.1} parent=5 // pred_check_branch
        %132 = sbr.rel (%p129) target = $region12
      $region11: #{tpu_custom_call.1} parent=5 // pred_region
        %s133 = ssub.s32 %s11, 1
        // Predicated region
        $region13: #{tpu_custom_call.1} parent=11 // pred_check
          %p134 = pneg %p51
        $region14: #{tpu_custom_call.1} parent=11 // pred_check_branch
          %136 = sbr.rel (%p134) target = $region16
        $region15: #{tpu_custom_call.1} parent=11 // pred_region
          _
        $region16: #{tpu_custom_call.1} parent=11 // pred_fallthru
          _
      $region12: #{tpu_custom_call.1} parent=5 // pred_fallthru
        _
      %p137 = scmp.lt.s32.totalorder %s11, 4
      // Predicated region
      $region17: #{tpu_custom_call.1} parent=5 // pred_check
        %p138 = pneg %p137
      $region18: #{tpu_custom_call.1} parent=5 // pred_check_branch
        %140 = sbr.rel (%p138) target = $region20
      $region19: #{tpu_custom_call.1} parent=5 // pred_region
        // Predicated region
        $region21: #{tpu_custom_call.1} parent=19 // pred_check
          %p141 = pneg %p81
        $region22: #{tpu_custom_call.1} parent=19 // pred_check_branch
          %143 = sbr.rel (%p141) target = $region24
        $region23: #{tpu_custom_call.1} parent=19 // pred_region
          %s144 = sand.u32 %s71, 1
          %s145 = sand.u32 %s71, 1
          %s146 = smul.addr %s145, 384
          %s147 = scalar_lea.vmem [#allocation3], %s146
          %s148 = smul.u32 %s19, 2
          %s149 = sadd.s32 %s148, %s20
          %p150 = scmp.lt.s32.totalorder %s149, 1
          %s151 = scalar_select %p150, %s149, 1
          %s152 = smul.u32 3, %s151
          %s153 = ssub.s32 4, %s152
          %p154 = scmp.lt.s32.totalorder %s153, 3
          %s155 = scalar_select %p154, %s153, 3
          %s156 = smul.u32 2048, %s155
          %p157 = scmp.ne.s32.totalorder 0, %s156
          %s158 = smul.addr %s18, 64
          %s159 = sadd.s32 %s152, %s158
          %s160 = smul.addr %s159, 8
          %s161 = scalar_lea.vmem %s1, %s160
          %s162 = smul.u32 %s155, 8
          // Predicated region
          $region25: #{tpu_custom_call.1} parent=23 // pred_check
            %p163 = pneg %p157
          $region26: #{tpu_custom_call.1} parent=23 // pred_check_branch
            %165 = sbr.rel (%p163) target = $region28
          $region27: #{tpu_custom_call.1} parent=23 // pred_region
            %p166 = scmp.lt.u32.totalorder %s162, 8
            %p167 = pneg %p166
            // Predicated region
            $region29: #{tpu_custom_call.1} parent=27 // pred_check
              _
            $region30: #{tpu_custom_call.1} parent=27 // pred_check_branch
              %169 = sbr.rel (%p166) target = $region32
            $region31: #{tpu_custom_call.1} parent=27 // pred_region
              %s215 = sand.u32 %s162, 7
              %p216 = scmp.eq.s32.totalorder %s215, 0
              // Predicated region
              $region44: #{tpu_custom_call.1} parent=31 // pred_check
                %p217 = pneg %p216
              $region45: #{tpu_custom_call.1} parent=31 // pred_check_branch
                %219 = sbr.rel (%p217) target = $region47
              $region46: #{tpu_custom_call.1} parent=31 // pred_region
                %s220 = sshrl.u32 %s162, 3
                %s221 = sshrl.u32 %s220, 2
                // While loop
                $region48: #{tpu_custom_call.1} parent=46 // loop_pre_header
                  _
                $region49: #{tpu_custom_call.1} parent=46 // loop_header
                  %s225 = sphi 0, %s227
                  %p226 = scmp.ge.s32.totalorder %s225, %s221
                  %s230 = sphi 0, %s363
                  %s231 = sphi %s161, %s366
                  %s232 = sphi %s147, %s367
                $region50: #{tpu_custom_call.1} parent=46 // loop_header_branch
                  %229 = sbr.rel (%p226) target = $region54
                $region51: #{tpu_custom_call.1} parent=46 // loop_body
                  %v233 = vld [vmem:[%s231] sm:$0xff]
                  %234 = vst [vmem:[%s232] sm:$0xff] %v233
                  %v235 = vld [vmem:[%s231 + $0x8] sm:$0xff]
                  %236 = vst [vmem:[%s232 + $0x8] sm:$0xff] %v235
                  %v237 = vld [vmem:[%s231 + $0x10] sm:$0xff]
                  %238 = vst [vmem:[%s232 + $0x10] sm:$0xff] %v237
                  %v239 = vld [vmem:[%s231 + $0x18] sm:$0xff]
                  %240 = vst [vmem:[%s232 + $0x18] sm:$0xff] %v239
                  %v241 = vld [vmem:[%s231 + $0x20] sm:$0xff]
                  %242 = vst [vmem:[%s232 + $0x18] sm:$0xff] %v241
                  %v243 = vld [vmem:[%s231 + $0x28] sm:$0xff]
                  %244 = vst [vmem:[%s232 + $0x20] sm:$0xff] %v243
                  %v245 = vld [vmem:[%s231 + $0x30] sm:$0xff]
                  %246 = vst [vmem:[%s232 + $0x28] sm:$0xff] %v245
                  %v247 = vld [vmem:[%s231 + $0x38] sm:$0xff]
                  %248 = vst [vmem:[%s232 + $0x30] sm:$0xff] %v247
                  %v249 = vld [vmem:[%s231 + $0x40] sm:$0xff]
                  %250 = vst [vmem:[%s232 + $0x30] sm:$0xff] %v249
                  %v251 = vld [vmem:[%s231 + $0x48] sm:$0xff]
                  %252 = vst [vmem:[%s232 + $0x38] sm:$0xff] %v251
                  %v253 = vld [vmem:[%s231 + $0x50] sm:$0xff]
                  %254 = vst [vmem:[%s232 + $0x40] sm:$0xff] %v253
                  %v255 = vld [vmem:[%s231 + $0x58] sm:$0xff]
                  %256 = vst [vmem:[%s232 + $0x48] sm:$0xff] %v255
                  %v257 = vld [vmem:[%s231 + $0x60] sm:$0xff]
                  %258 = vst [vmem:[%s232 + $0x48] sm:$0xff] %v257
                  %v259 = vld [vmem:[%s231 + $0x68] sm:$0xff]
                  %260 = vst [vmem:[%s232 + $0x50] sm:$0xff] %v259
                  %v261 = vld [vmem:[%s231 + $0x70] sm:$0xff]
                  %262 = vst [vmem:[%s232 + $0x58] sm:$0xff] %v261
                  %v263 = vld [vmem:[%s231 + $0x78] sm:$0xff]
                  %264 = vst [vmem:[%s232 + $0x60] sm:$0xff] %v263
                  %v265 = vld [vmem:[%s231 + $0x80] sm:$0xff]
                  %266 = vst [vmem:[%s232 + $0x60] sm:$0xff] %v265
                  %v267 = vld [vmem:[%s231 + $0x88] sm:$0xff]
                  %268 = vst [vmem:[%s232 + $0x68] sm:$0xff] %v267
                  %v269 = vld [vmem:[%s231 + $0x90] sm:$0xff]
                  %270 = vst [vmem:[%s232 + $0x70] sm:$0xff] %v269
                  %v271 = vld [vmem:[%s231 + $0x98] sm:$0xff]
                  %272 = vst [vmem:[%s232 + $0x78] sm:$0xff] %v271
                  %v273 = vld [vmem:[%s231 + $0xa0] sm:$0xff]
                  %274 = vst [vmem:[%s232 + $0x78] sm:$0xff] %v273
                  %v275 = vld [vmem:[%s231 + $0xa8] sm:$0xff]
                  %276 = vst [vmem:[%s232 + $0x80] sm:$0xff] %v275
                  %v277 = vld [vmem:[%s231 + $0xb0] sm:$0xff]
                  %278 = vst [vmem:[%s232 + $0x88] sm:$0xff] %v277
                  %v279 = vld [vmem:[%s231 + $0xb8] sm:$0xff]
                  %280 = vst [vmem:[%s232 + $0x90] sm:$0xff] %v279
                  %v281 = vld [vmem:[%s231 + $0xc0] sm:$0xff]
                  %282 = vst [vmem:[%s232 + $0x90] sm:$0xff] %v281
                  %v283 = vld [vmem:[%s231 + $0xc8] sm:$0xff]
                  %284 = vst [vmem:[%s232 + $0x98] sm:$0xff] %v283
                  %v285 = vld [vmem:[%s231 + $0xd0] sm:$0xff]
                  %286 = vst [vmem:[%s232 + $0xa0] sm:$0xff] %v285
                  %v287 = vld [vmem:[%s231 + $0xd8] sm:$0xff]
                  %288 = vst [vmem:[%s232 + $0xa8] sm:$0xff] %v287
                  %v289 = vld [vmem:[%s231 + $0xe0] sm:$0xff]
                  %290 = vst [vmem:[%s232 + $0xa8] sm:$0xff] %v289
                  %v291 = vld [vmem:[%s231 + $0xe8] sm:$0xff]
                  %292 = vst [vmem:[%s232 + $0xb0] sm:$0xff] %v291
                  %v293 = vld [vmem:[%s231 + $0xf0] sm:$0xff]
                  %294 = vst [vmem:[%s232 + $0xb8] sm:$0xff] %v293
                  %v295 = vld [vmem:[%s231 + $0xf8] sm:$0xff]
                  %296 = vst [vmem:[%s232 + $0xc0] sm:$0xff] %v295
                  %v297 = vld [vmem:[%s231 + $0x100] sm:$0xff]
                  %298 = vst [vmem:[%s232 + $0xc0] sm:$0xff] %v297
                  %v299 = vld [vmem:[%s231 + $0x108] sm:$0xff]
                  %300 = vst [vmem:[%s232 + $0xc8] sm:$0xff] %v299
                  %v301 = vld [vmem:[%s231 + $0x110] sm:$0xff]
                  %302 = vst [vmem:[%s232 + $0xd0] sm:$0xff] %v301
                  %v303 = vld [vmem:[%s231 + $0x118] sm:$0xff]
                  %304 = vst [vmem:[%s232 + $0xd8] sm:$0xff] %v303
                  %v305 = vld [vmem:[%s231 + $0x120] sm:$0xff]
                  %306 = vst [vmem:[%s232 + $0xd8] sm:$0xff] %v305
                  %v307 = vld [vmem:[%s231 + $0x128] sm:$0xff]
                  %308 = vst [vmem:[%s232 + $0xe0] sm:$0xff] %v307
                  %v309 = vld [vmem:[%s231 + $0x130] sm:$0xff]
                  %310 = vst [vmem:[%s232 + $0xe8] sm:$0xff] %v309
                  %v311 = vld [vmem:[%s231 + $0x138] sm:$0xff]
                  %312 = vst [vmem:[%s232 + $0xf0] sm:$0xff] %v311
                  %v313 = vld [vmem:[%s231 + $0x140] sm:$0xff]
                  %314 = vst [vmem:[%s232 + $0xf0] sm:$0xff] %v313
                  %v315 = vld [vmem:[%s231 + $0x148] sm:$0xff]
                  %316 = vst [vmem:[%s232 + $0xf8] sm:$0xff] %v315
                  %v317 = vld [vmem:[%s231 + $0x150] sm:$0xff]
                  %318 = vst [vmem:[%s232 + $0x100] sm:$0xff] %v317
                  %v319 = vld [vmem:[%s231 + $0x158] sm:$0xff]
                  %320 = vst [vmem:[%s232 + $0x108] sm:$0xff] %v319
                  %v321 = vld [vmem:[%s231 + $0x160] sm:$0xff]
                  %322 = vst [vmem:[%s232 + $0x108] sm:$0xff] %v321
                  %v323 = vld [vmem:[%s231 + $0x168] sm:$0xff]
                  %324 = vst [vmem:[%s232 + $0x110] sm:$0xff] %v323
                  %v325 = vld [vmem:[%s231 + $0x170] sm:$0xff]
                  %326 = vst [vmem:[%s232 + $0x118] sm:$0xff] %v325
                  %v327 = vld [vmem:[%s231 + $0x178] sm:$0xff]
                  %328 = vst [vmem:[%s232 + $0x120] sm:$0xff] %v327
                  %v329 = vld [vmem:[%s231 + $0x180] sm:$0xff]
                  %330 = vst [vmem:[%s232 + $0x120] sm:$0xff] %v329
                  %v331 = vld [vmem:[%s231 + $0x188] sm:$0xff]
                  %332 = vst [vmem:[%s232 + $0x128] sm:$0xff] %v331
                  %v333 = vld [vmem:[%s231 + $0x190] sm:$0xff]
                  %334 = vst [vmem:[%s232 + $0x130] sm:$0xff] %v333
                  %v335 = vld [vmem:[%s231 + $0x198] sm:$0xff]
                  %336 = vst [vmem:[%s232 + $0x138] sm:$0xff] %v335
                  %v337 = vld [vmem:[%s231 + $0x1a0] sm:$0xff]
                  %338 = vst [vmem:[%s232 + $0x138] sm:$0xff] %v337
                  %v339 = vld [vmem:[%s231 + $0x1a8] sm:$0xff]
                  %340 = vst [vmem:[%s232 + $0x140] sm:$0xff] %v339
                  %v341 = vld [vmem:[%s231 + $0x1b0] sm:$0xff]
                  %342 = vst [vmem:[%s232 + $0x148] sm:$0xff] %v341
                  %v343 = vld [vmem:[%s231 + $0x1b8] sm:$0xff]
                  %344 = vst [vmem:[%s232 + $0x150] sm:$0xff] %v343
                  %v345 = vld [vmem:[%s231 + $0x1c0] sm:$0xff]
                  %346 = vst [vmem:[%s232 + $0x150] sm:$0xff] %v345
                  %v347 = vld [vmem:[%s231 + $0x1c8] sm:$0xff]
                  %348 = vst [vmem:[%s232 + $0x158] sm:$0xff] %v347
                  %v349 = vld [vmem:[%s231 + $0x1d0] sm:$0xff]
                  %350 = vst [vmem:[%s232 + $0x160] sm:$0xff] %v349
                  %v351 = vld [vmem:[%s231 + $0x1d8] sm:$0xff]
                  %352 = vst [vmem:[%s232 + $0x168] sm:$0xff] %v351
                  %v353 = vld [vmem:[%s231 + $0x1e0] sm:$0xff]
                  %354 = vst [vmem:[%s232 + $0x168] sm:$0xff] %v353
                  %v355 = vld [vmem:[%s231 + $0x1e8] sm:$0xff]
                  %356 = vst [vmem:[%s232 + $0x170] sm:$0xff] %v355
                  %v357 = vld [vmem:[%s231 + $0x1f0] sm:$0xff]
                  %358 = vst [vmem:[%s232 + $0x178] sm:$0xff] %v357
                  %v359 = vld [vmem:[%s231 + $0x1f8] sm:$0xff]
                  %360 = vst [vmem:[%s232 + $0x180] sm:$0xff] %v359
                  %s361 = sadd.s32 1, %s230
                  %p362 = scmp.ge.s32.totalorder %s361, %s221
                  %s363 = scalar_select %p362, 0, %s361
                  %s364 = smul.u32 %s363, 32
                  %s365 = smul.u32 %s363, 32
                  %s366 = scalar_lea.vmem %s161, %s364
                  %s367 = scalar_lea.vmem %s147, %s365 [#allocation3]
                $region52: #{tpu_custom_call.1} parent=46 // loop_footer
                  %s227 = sadd.s32 %s225, 1
                $region53: #{tpu_custom_call.1} parent=46 // loop_footer_branch
                  %224 = sbr.rel target = $region49
                $region54: #{tpu_custom_call.1} parent=46 // loop_exit
                  _
                %s368 = sshrl.u32 %s220, 2
                %s369 = sand.u32 %s220, 3
                %s370 = smul.u32 %s368, 4
                %s371 = smul.u32 128, %s370
                %s372 = sshra.s32 %s371, 4
                %s373 = scalar_lea.vmem %s161, %s372
                %s374 = smul.u32 128, %s370
                %s375 = sshra.s32 %s374, 4
                %s376 = scalar_lea.vmem %s147, %s375 [#allocation3]
                // While loop
                $region55: #{tpu_custom_call.1} parent=46 // loop_pre_header
                  _
                $region56: #{tpu_custom_call.1} parent=46 // loop_header
                  %s380 = sphi 0, %s382
                  %p381 = scmp.ge.s32.totalorder %s380, %s369
                  %s385 = sphi 0, %s422
                  %s386 = sphi %s373, %s425
                  %s387 = sphi %s376, %s426
                $region57: #{tpu_custom_call.1} parent=46 // loop_header_branch
                  %384 = sbr.rel (%p381) target = $region61
                $region58: #{tpu_custom_call.1} parent=46 // loop_body
                  %v388 = vld [vmem:[%s386] sm:$0xff]
                  %389 = vst [vmem:[%s387] sm:$0xff] %v388
                  %v390 = vld [vmem:[%s386 + $0x20] sm:$0xff]
                  %391 = vst [vmem:[%s387 + $0x18] sm:$0xff] %v390
                  %v392 = vld [vmem:[%s386 + $0x40] sm:$0xff]
                  %393 = vst [vmem:[%s387 + $0x30] sm:$0xff] %v392
                  %v394 = vld [vmem:[%s386 + $0x60] sm:$0xff]
                  %395 = vst [vmem:[%s387 + $0x48] sm:$0xff] %v394
                  %v396 = vld [vmem:[%s386 + $0x80] sm:$0xff]
                  %397 = vst [vmem:[%s387 + $0x60] sm:$0xff] %v396
                  %v398 = vld [vmem:[%s386 + $0xa0] sm:$0xff]
                  %399 = vst [vmem:[%s387 + $0x78] sm:$0xff] %v398
                  %v400 = vld [vmem:[%s386 + $0xc0] sm:$0xff]
                  %401 = vst [vmem:[%s387 + $0x90] sm:$0xff] %v400
                  %v402 = vld [vmem:[%s386 + $0xe0] sm:$0xff]
                  %403 = vst [vmem:[%s387 + $0xa8] sm:$0xff] %v402
                  %v404 = vld [vmem:[%s386 + $0x100] sm:$0xff]
                  %405 = vst [vmem:[%s387 + $0xc0] sm:$0xff] %v404
                  %v406 = vld [vmem:[%s386 + $0x120] sm:$0xff]
                  %407 = vst [vmem:[%s387 + $0xd8] sm:$0xff] %v406
                  %v408 = vld [vmem:[%s386 + $0x140] sm:$0xff]
                  %409 = vst [vmem:[%s387 + $0xf0] sm:$0xff] %v408
                  %v410 = vld [vmem:[%s386 + $0x160] sm:$0xff]
                  %411 = vst [vmem:[%s387 + $0x108] sm:$0xff] %v410
                  %v412 = vld [vmem:[%s386 + $0x180] sm:$0xff]
                  %413 = vst [vmem:[%s387 + $0x120] sm:$0xff] %v412
                  %v414 = vld [vmem:[%s386 + $0x1a0] sm:$0xff]
                  %415 = vst [vmem:[%s387 + $0x138] sm:$0xff] %v414
                  %v416 = vld [vmem:[%s386 + $0x1c0] sm:$0xff]
                  %417 = vst [vmem:[%s387 + $0x150] sm:$0xff] %v416
                  %v418 = vld [vmem:[%s386 + $0x1e0] sm:$0xff]
                  %419 = vst [vmem:[%s387 + $0x168] sm:$0xff] %v418
                  %s420 = sadd.s32 1, %s385
                  %p421 = scmp.ge.s32.totalorder %s420, %s369
                  %s422 = scalar_select %p421, 0, %s420
                  %s423 = smul.u32 %s422, 8
                  %s424 = smul.u32 %s422, 8
                  %s425 = scalar_lea.vmem %s373, %s423
                  %s426 = scalar_lea.vmem %s376, %s424 [#allocation3]
                $region59: #{tpu_custom_call.1} parent=46 // loop_footer
                  %s382 = sadd.s32 %s380, 1
                $region60: #{tpu_custom_call.1} parent=46 // loop_footer_branch
                  %379 = sbr.rel target = $region56
                $region61: #{tpu_custom_call.1} parent=46 // loop_exit
                  _
              $region47: #{tpu_custom_call.1} parent=31 // pred_fallthru
                _
              %p427 = pneg %p216
              // Predicated region
              $region62: #{tpu_custom_call.1} parent=31 // pred_check
                _
              $region63: #{tpu_custom_call.1} parent=31 // pred_check_branch
                %429 = sbr.rel (%p216) target = $region65
              $region64: #{tpu_custom_call.1} parent=31 // pred_region
                %s430 = sand.u32 %s162, 7
                %s431 = ssub.s32 %s162, %s430
                %s432 = scalar_lea.vmem %s161, %s431
                %s433 = ssub.s32 %s162, %s430
                %s434 = scalar_lea.vmem %s147, %s433 [#allocation3]
                %s435 = sshrl.u32 %s162, 3
                %s436 = sshrl.u32 %s435, 2
                // While loop
                $region66: #{tpu_custom_call.1} parent=64 // loop_pre_header
                  _
                $region67: #{tpu_custom_call.1} parent=64 // loop_header
                  %s440 = sphi 0, %s442
                  %p441 = scmp.ge.s32.totalorder %s440, %s436
                  %s445 = sphi 0, %s578
                  %s446 = sphi %s161, %s581
                  %s447 = sphi %s147, %s582
                $region68: #{tpu_custom_call.1} parent=64 // loop_header_branch
                  %444 = sbr.rel (%p441) target = $region72
                $region69: #{tpu_custom_call.1} parent=64 // loop_body
                  %v448 = vld [vmem:[%s446] sm:$0xff]
                  %449 = vst [vmem:[%s447] sm:$0xff] %v448
                  %v450 = vld [vmem:[%s446 + $0x8] sm:$0xff]
                  %451 = vst [vmem:[%s447 + $0x8] sm:$0xff] %v450
                  %v452 = vld [vmem:[%s446 + $0x10] sm:$0xff]
                  %453 = vst [vmem:[%s447 + $0x10] sm:$0xff] %v452
                  %v454 = vld [vmem:[%s446 + $0x18] sm:$0xff]
                  %455 = vst [vmem:[%s447 + $0x18] sm:$0xff] %v454
                  %v456 = vld [vmem:[%s446 + $0x20] sm:$0xff]
                  %457 = vst [vmem:[%s447 + $0x18] sm:$0xff] %v456
                  %v458 = vld [vmem:[%s446 + $0x28] sm:$0xff]
                  %459 = vst [vmem:[%s447 + $0x20] sm:$0xff] %v458
                  %v460 = vld [vmem:[%s446 + $0x30] sm:$0xff]
                  %461 = vst [vmem:[%s447 + $0x28] sm:$0xff] %v460
                  %v462 = vld [vmem:[%s446 + $0x38] sm:$0xff]
                  %463 = vst [vmem:[%s447 + $0x30] sm:$0xff] %v462
                  %v464 = vld [vmem:[%s446 + $0x40] sm:$0xff]
                  %465 = vst [vmem:[%s447 + $0x30] sm:$0xff] %v464
                  %v466 = vld [vmem:[%s446 + $0x48] sm:$0xff]
                  %467 = vst [vmem:[%s447 + $0x38] sm:$0xff] %v466
                  %v468 = vld [vmem:[%s446 + $0x50] sm:$0xff]
                  %469 = vst [vmem:[%s447 + $0x40] sm:$0xff] %v468
                  %v470 = vld [vmem:[%s446 + $0x58] sm:$0xff]
                  %471 = vst [vmem:[%s447 + $0x48] sm:$0xff] %v470
                  %v472 = vld [vmem:[%s446 + $0x60] sm:$0xff]
                  %473 = vst [vmem:[%s447 + $0x48] sm:$0xff] %v472
                  %v474 = vld [vmem:[%s446 + $0x68] sm:$0xff]
                  %475 = vst [vmem:[%s447 + $0x50] sm:$0xff] %v474
                  %v476 = vld [vmem:[%s446 + $0x70] sm:$0xff]
                  %477 = vst [vmem:[%s447 + $0x58] sm:$0xff] %v476
                  %v478 = vld [vmem:[%s446 + $0x78] sm:$0xff]
                  %479 = vst [vmem:[%s447 + $0x60] sm:$0xff] %v478
                  %v480 = vld [vmem:[%s446 + $0x80] sm:$0xff]
                  %481 = vst [vmem:[%s447 + $0x60] sm:$0xff] %v480
                  %v482 = vld [vmem:[%s446 + $0x88] sm:$0xff]
                  %483 = vst [vmem:[%s447 + $0x68] sm:$0xff] %v482
                  %v484 = vld [vmem:[%s446 + $0x90] sm:$0xff]
                  %485 = vst [vmem:[%s447 + $0x70] sm:$0xff] %v484
                  %v486 = vld [vmem:[%s446 + $0x98] sm:$0xff]
                  %487 = vst [vmem:[%s447 + $0x78] sm:$0xff] %v486
                  %v488 = vld [vmem:[%s446 + $0xa0] sm:$0xff]
                  %489 = vst [vmem:[%s447 + $0x78] sm:$0xff] %v488
                  %v490 = vld [vmem:[%s446 + $0xa8] sm:$0xff]
                  %491 = vst [vmem:[%s447 + $0x80] sm:$0xff] %v490
                  %v492 = vld [vmem:[%s446 + $0xb0] sm:$0xff]
                  %493 = vst [vmem:[%s447 + $0x88] sm:$0xff] %v492
                  %v494 = vld [vmem:[%s446 + $0xb8] sm:$0xff]
                  %495 = vst [vmem:[%s447 + $0x90] sm:$0xff] %v494
                  %v496 = vld [vmem:[%s446 + $0xc0] sm:$0xff]
                  %497 = vst [vmem:[%s447 + $0x90] sm:$0xff] %v496
                  %v498 = vld [vmem:[%s446 + $0xc8] sm:$0xff]
                  %499 = vst [vmem:[%s447 + $0x98] sm:$0xff] %v498
                  %v500 = vld [vmem:[%s446 + $0xd0] sm:$0xff]
                  %501 = vst [vmem:[%s447 + $0xa0] sm:$0xff] %v500
                  %v502 = vld [vmem:[%s446 + $0xd8] sm:$0xff]
                  %503 = vst [vmem:[%s447 + $0xa8] sm:$0xff] %v502
                  %v504 = vld [vmem:[%s446 + $0xe0] sm:$0xff]
                  %505 = vst [vmem:[%s447 + $0xa8] sm:$0xff] %v504
                  %v506 = vld [vmem:[%s446 + $0xe8] sm:$0xff]
                  %507 = vst [vmem:[%s447 + $0xb0] sm:$0xff] %v506
                  %v508 = vld [vmem:[%s446 + $0xf0] sm:$0xff]
                  %509 = vst [vmem:[%s447 + $0xb8] sm:$0xff] %v508
                  %v510 = vld [vmem:[%s446 + $0xf8] sm:$0xff]
                  %511 = vst [vmem:[%s447 + $0xc0] sm:$0xff] %v510
                  %v512 = vld [vmem:[%s446 + $0x100] sm:$0xff]
                  %513 = vst [vmem:[%s447 + $0xc0] sm:$0xff] %v512
                  %v514 = vld [vmem:[%s446 + $0x108] sm:$0xff]
                  %515 = vst [vmem:[%s447 + $0xc8] sm:$0xff] %v514
                  %v516 = vld [vmem:[%s446 + $0x110] sm:$0xff]
                  %517 = vst [vmem:[%s447 + $0xd0] sm:$0xff] %v516
                  %v518 = vld [vmem:[%s446 + $0x118] sm:$0xff]
                  %519 = vst [vmem:[%s447 + $0xd8] sm:$0xff] %v518
                  %v520 = vld [vmem:[%s446 + $0x120] sm:$0xff]
                  %521 = vst [vmem:[%s447 + $0xd8] sm:$0xff] %v520
                  %v522 = vld [vmem:[%s446 + $0x128] sm:$0xff]
                  %523 = vst [vmem:[%s447 + $0xe0] sm:$0xff] %v522
                  %v524 = vld [vmem:[%s446 + $0x130] sm:$0xff]
                  %525 = vst [vmem:[%s447 + $0xe8] sm:$0xff] %v524
                  %v526 = vld [vmem:[%s446 + $0x138] sm:$0xff]
                  %527 = vst [vmem:[%s447 + $0xf0] sm:$0xff] %v526
                  %v528 = vld [vmem:[%s446 + $0x140] sm:$0xff]
                  %529 = vst [vmem:[%s447 + $0xf0] sm:$0xff] %v528
                  %v530 = vld [vmem:[%s446 + $0x148] sm:$0xff]
                  %531 = vst [vmem:[%s447 + $0xf8] sm:$0xff] %v530
                  %v532 = vld [vmem:[%s446 + $0x150] sm:$0xff]
                  %533 = vst [vmem:[%s447 + $0x100] sm:$0xff] %v532
                  %v534 = vld [vmem:[%s446 + $0x158] sm:$0xff]
                  %535 = vst [vmem:[%s447 + $0x108] sm:$0xff] %v534
                  %v536 = vld [vmem:[%s446 + $0x160] sm:$0xff]
                  %537 = vst [vmem:[%s447 + $0x108] sm:$0xff] %v536
                  %v538 = vld [vmem:[%s446 + $0x168] sm:$0xff]
                  %539 = vst [vmem:[%s447 + $0x110] sm:$0xff] %v538
                  %v540 = vld [vmem:[%s446 + $0x170] sm:$0xff]
                  %541 = vst [vmem:[%s447 + $0x118] sm:$0xff] %v540
                  %v542 = vld [vmem:[%s446 + $0x178] sm:$0xff]
                  %543 = vst [vmem:[%s447 + $0x120] sm:$0xff] %v542
                  %v544 = vld [vmem:[%s446 + $0x180] sm:$0xff]
                  %545 = vst [vmem:[%s447 + $0x120] sm:$0xff] %v544
                  %v546 = vld [vmem:[%s446 + $0x188] sm:$0xff]
                  %547 = vst [vmem:[%s447 + $0x128] sm:$0xff] %v546
                  %v548 = vld [vmem:[%s446 + $0x190] sm:$0xff]
                  %549 = vst [vmem:[%s447 + $0x130] sm:$0xff] %v548
                  %v550 = vld [vmem:[%s446 + $0x198] sm:$0xff]
                  %551 = vst [vmem:[%s447 + $0x138] sm:$0xff] %v550
                  %v552 = vld [vmem:[%s446 + $0x1a0] sm:$0xff]
                  %553 = vst [vmem:[%s447 + $0x138] sm:$0xff] %v552
                  %v554 = vld [vmem:[%s446 + $0x1a8] sm:$0xff]
                  %555 = vst [vmem:[%s447 + $0x140] sm:$0xff] %v554
                  %v556 = vld [vmem:[%s446 + $0x1b0] sm:$0xff]
                  %557 = vst [vmem:[%s447 + $0x148] sm:$0xff] %v556
                  %v558 = vld [vmem:[%s446 + $0x1b8] sm:$0xff]
                  %559 = vst [vmem:[%s447 + $0x150] sm:$0xff] %v558
                  %v560 = vld [vmem:[%s446 + $0x1c0] sm:$0xff]
                  %561 = vst [vmem:[%s447 + $0x150] sm:$0xff] %v560
                  %v562 = vld [vmem:[%s446 + $0x1c8] sm:$0xff]
                  %563 = vst [vmem:[%s447 + $0x158] sm:$0xff] %v562
                  %v564 = vld [vmem:[%s446 + $0x1d0] sm:$0xff]
                  %565 = vst [vmem:[%s447 + $0x160] sm:$0xff] %v564
                  %v566 = vld [vmem:[%s446 + $0x1d8] sm:$0xff]
                  %567 = vst [vmem:[%s447 + $0x168] sm:$0xff] %v566
                  %v568 = vld [vmem:[%s446 + $0x1e0] sm:$0xff]
                  %569 = vst [vmem:[%s447 + $0x168] sm:$0xff] %v568
                  %v570 = vld [vmem:[%s446 + $0x1e8] sm:$0xff]
                  %571 = vst [vmem:[%s447 + $0x170] sm:$0xff] %v570
                  %v572 = vld [vmem:[%s446 + $0x1f0] sm:$0xff]
                  %573 = vst [vmem:[%s447 + $0x178] sm:$0xff] %v572
                  %v574 = vld [vmem:[%s446 + $0x1f8] sm:$0xff]
                  %575 = vst [vmem:[%s447 + $0x180] sm:$0xff] %v574
                  %s576 = sadd.s32 1, %s445
                  %p577 = scmp.ge.s32.totalorder %s576, %s436
                  %s578 = scalar_select %p577, 0, %s576
                  %s579 = smul.u32 %s578, 32
                  %s580 = smul.u32 %s578, 32
                  %s581 = scalar_lea.vmem %s161, %s579
                  %s582 = scalar_lea.vmem %s147, %s580 [#allocation3]
                $region70: #{tpu_custom_call.1} parent=64 // loop_footer
                  %s442 = sadd.s32 %s440, 1
                $region71: #{tpu_custom_call.1} parent=64 // loop_footer_branch
                  %439 = sbr.rel target = $region67
                $region72: #{tpu_custom_call.1} parent=64 // loop_exit
                  _
                %s583 = sshrl.u32 %s435, 2
                %s584 = sand.u32 %s435, 3
                %s585 = smul.u32 %s583, 4
                %s586 = smul.u32 128, %s585
                %s587 = sshra.s32 %s586, 4
                %s588 = scalar_lea.vmem %s161, %s587
                %s589 = smul.u32 128, %s585
                %s590 = sshra.s32 %s589, 4
                %s591 = scalar_lea.vmem %s147, %s590 [#allocation3]
                // While loop
                $region73: #{tpu_custom_call.1} parent=64 // loop_pre_header
                  _
                $region74: #{tpu_custom_call.1} parent=64 // loop_header
                  %s595 = sphi 0, %s597
                  %p596 = scmp.ge.s32.totalorder %s595, %s584
                  %s600 = sphi 0, %s637
                  %s601 = sphi %s588, %s640
                  %s602 = sphi %s591, %s641
                $region75: #{tpu_custom_call.1} parent=64 // loop_header_branch
                  %599 = sbr.rel (%p596) target = $region79
                $region76: #{tpu_custom_call.1} parent=64 // loop_body
                  %v603 = vld [vmem:[%s601] sm:$0xff]
                  %604 = vst [vmem:[%s602] sm:$0xff] %v603
                  %v605 = vld [vmem:[%s601 + $0x20] sm:$0xff]
                  %606 = vst [vmem:[%s602 + $0x18] sm:$0xff] %v605
                  %v607 = vld [vmem:[%s601 + $0x40] sm:$0xff]
                  %608 = vst [vmem:[%s602 + $0x30] sm:$0xff] %v607
                  %v609 = vld [vmem:[%s601 + $0x60] sm:$0xff]
                  %610 = vst [vmem:[%s602 + $0x48] sm:$0xff] %v609
                  %v611 = vld [vmem:[%s601 + $0x80] sm:$0xff]
                  %612 = vst [vmem:[%s602 + $0x60] sm:$0xff] %v611
                  %v613 = vld [vmem:[%s601 + $0xa0] sm:$0xff]
                  %614 = vst [vmem:[%s602 + $0x78] sm:$0xff] %v613
                  %v615 = vld [vmem:[%s601 + $0xc0] sm:$0xff]
                  %616 = vst [vmem:[%s602 + $0x90] sm:$0xff] %v615
                  %v617 = vld [vmem:[%s601 + $0xe0] sm:$0xff]
                  %618 = vst [vmem:[%s602 + $0xa8] sm:$0xff] %v617
                  %v619 = vld [vmem:[%s601 + $0x100] sm:$0xff]
                  %620 = vst [vmem:[%s602 + $0xc0] sm:$0xff] %v619
                  %v621 = vld [vmem:[%s601 + $0x120] sm:$0xff]
                  %622 = vst [vmem:[%s602 + $0xd8] sm:$0xff] %v621
                  %v623 = vld [vmem:[%s601 + $0x140] sm:$0xff]
                  %624 = vst [vmem:[%s602 + $0xf0] sm:$0xff] %v623
                  %v625 = vld [vmem:[%s601 + $0x160] sm:$0xff]
                  %626 = vst [vmem:[%s602 + $0x108] sm:$0xff] %v625
                  %v627 = vld [vmem:[%s601 + $0x180] sm:$0xff]
                  %628 = vst [vmem:[%s602 + $0x120] sm:$0xff] %v627
                  %v629 = vld [vmem:[%s601 + $0x1a0] sm:$0xff]
                  %630 = vst [vmem:[%s602 + $0x138] sm:$0xff] %v629
                  %v631 = vld [vmem:[%s601 + $0x1c0] sm:$0xff]
                  %632 = vst [vmem:[%s602 + $0x150] sm:$0xff] %v631
                  %v633 = vld [vmem:[%s601 + $0x1e0] sm:$0xff]
                  %634 = vst [vmem:[%s602 + $0x168] sm:$0xff] %v633
                  %s635 = sadd.s32 1, %s600
                  %p636 = scmp.ge.s32.totalorder %s635, %s584
                  %s637 = scalar_select %p636, 0, %s635
                  %s638 = smul.u32 %s637, 8
                  %s639 = smul.u32 %s637, 8
                  %s640 = scalar_lea.vmem %s588, %s638
                  %s641 = scalar_lea.vmem %s591, %s639 [#allocation3]
                $region77: #{tpu_custom_call.1} parent=64 // loop_footer
                  %s597 = sadd.s32 %s595, 1
                $region78: #{tpu_custom_call.1} parent=64 // loop_footer_branch
                  %594 = sbr.rel target = $region74
                $region79: #{tpu_custom_call.1} parent=64 // loop_exit
                  _
                %s642 = sshll.u32 1, %s430
                %s643 = ssub.s32 %s642, 1
                loop: start=0, step=1, limit=1
                $region80: #{tpu_custom_call.1} parent=64 // loop_pre_header
                  _
                $region81: #{tpu_custom_call.1} parent=64 // loop_header
                  %s645 = sphi 0, %s649
                  %p646 = scmp.ge.s32.totalorder %s645, 1
                  %s650 = sphi %s432, %s432
                  %s651 = sphi %s434, %s434
                $region82: #{tpu_custom_call.1} parent=64 // loop_header_branch
                  %648 = sbr.rel (%p646) target = $region86
                $region83: #{tpu_custom_call.1} parent=64 // loop_body
                  %v652 = vld [vmem:[%s650] sm:%s643]
                  %653 = vst [vmem:[%s651] sm:%s643] %v652
                  %v654 = vld [vmem:[%s650 + $0x20] sm:%s643]
                  %655 = vst [vmem:[%s651 + $0x18] sm:%s643] %v654
                  %v656 = vld [vmem:[%s650 + $0x40] sm:%s643]
                  %657 = vst [vmem:[%s651 + $0x30] sm:%s643] %v656
                  %v658 = vld [vmem:[%s650 + $0x60] sm:%s643]
                  %659 = vst [vmem:[%s651 + $0x48] sm:%s643] %v658
                  %v660 = vld [vmem:[%s650 + $0x80] sm:%s643]
                  %661 = vst [vmem:[%s651 + $0x60] sm:%s643] %v660
                  %v662 = vld [vmem:[%s650 + $0xa0] sm:%s643]
                  %663 = vst [vmem:[%s651 + $0x78] sm:%s643] %v662
                  %v664 = vld [vmem:[%s650 + $0xc0] sm:%s643]
                  %665 = vst [vmem:[%s651 + $0x90] sm:%s643] %v664
                  %v666 = vld [vmem:[%s650 + $0xe0] sm:%s643]
                  %667 = vst [vmem:[%s651 + $0xa8] sm:%s643] %v666
                  %v668 = vld [vmem:[%s650 + $0x100] sm:%s643]
                  %669 = vst [vmem:[%s651 + $0xc0] sm:%s643] %v668
                  %v670 = vld [vmem:[%s650 + $0x120] sm:%s643]
                  %671 = vst [vmem:[%s651 + $0xd8] sm:%s643] %v670
                  %v672 = vld [vmem:[%s650 + $0x140] sm:%s643]
                  %673 = vst [vmem:[%s651 + $0xf0] sm:%s643] %v672
                  %v674 = vld [vmem:[%s650 + $0x160] sm:%s643]
                  %675 = vst [vmem:[%s651 + $0x108] sm:%s643] %v674
                  %v676 = vld [vmem:[%s650 + $0x180] sm:%s643]
                  %677 = vst [vmem:[%s651 + $0x120] sm:%s643] %v676
                  %v678 = vld [vmem:[%s650 + $0x1a0] sm:%s643]
                  %679 = vst [vmem:[%s651 + $0x138] sm:%s643] %v678
                  %v680 = vld [vmem:[%s650 + $0x1c0] sm:%s643]
                  %681 = vst [vmem:[%s651 + $0x150] sm:%s643] %v680
                  %v682 = vld [vmem:[%s650 + $0x1e0] sm:%s643]
                  %683 = vst [vmem:[%s651 + $0x168] sm:%s643] %v682
                $region84: #{tpu_custom_call.1} parent=64 // loop_footer
                  %s649 = sadd.s32 1, %s645
                $region85: #{tpu_custom_call.1} parent=64 // loop_footer_branch
                  %644 = sbr.rel target = $region81
                $region86: #{tpu_custom_call.1} parent=64 // loop_exit
                  _
              $region65: #{tpu_custom_call.1} parent=31 // pred_fallthru
                _
            $region32: #{tpu_custom_call.1} parent=27 // pred_fallthru
              _
            // Predicated region
            $region33: #{tpu_custom_call.1} parent=27 // pred_check
              %p170 = pneg %p166
            $region34: #{tpu_custom_call.1} parent=27 // pred_check_branch
              %172 = sbr.rel (%p170) target = $region36
            $region35: #{tpu_custom_call.1} parent=27 // pred_region
              %s173 = sshll.u32 1, %s162
              %s174 = ssub.s32 %s173, 1
              loop: start=0, step=1, limit=1
              $region37: #{tpu_custom_call.1} parent=35 // loop_pre_header
                _
              $region38: #{tpu_custom_call.1} parent=35 // loop_header
                %s176 = sphi 0, %s180
                %p177 = scmp.ge.s32.totalorder %s176, 1
                %s181 = sphi %s161, %s161
                %s182 = sphi %s147, %s147
              $region39: #{tpu_custom_call.1} parent=35 // loop_header_branch
                %179 = sbr.rel (%p177) target = $region43
              $region40: #{tpu_custom_call.1} parent=35 // loop_body
                %v183 = vld [vmem:[%s181] sm:%s174]
                %184 = vst [vmem:[%s182] sm:%s174] %v183
                %v185 = vld [vmem:[%s181 + $0x20] sm:%s174]
                %186 = vst [vmem:[%s182 + $0x18] sm:%s174] %v185
                %v187 = vld [vmem:[%s181 + $0x40] sm:%s174]
                %188 = vst [vmem:[%s182 + $0x30] sm:%s174] %v187
                %v189 = vld [vmem:[%s181 + $0x60] sm:%s174]
                %190 = vst [vmem:[%s182 + $0x48] sm:%s174] %v189
                %v191 = vld [vmem:[%s181 + $0x80] sm:%s174]
                %192 = vst [vmem:[%s182 + $0x60] sm:%s174] %v191
                %v193 = vld [vmem:[%s181 + $0xa0] sm:%s174]
                %194 = vst [vmem:[%s182 + $0x78] sm:%s174] %v193
                %v195 = vld [vmem:[%s181 + $0xc0] sm:%s174]
                %196 = vst [vmem:[%s182 + $0x90] sm:%s174] %v195
                %v197 = vld [vmem:[%s181 + $0xe0] sm:%s174]
                %198 = vst [vmem:[%s182 + $0xa8] sm:%s174] %v197
                %v199 = vld [vmem:[%s181 + $0x100] sm:%s174]
                %200 = vst [vmem:[%s182 + $0xc0] sm:%s174] %v199
                %v201 = vld [vmem:[%s181 + $0x120] sm:%s174]
                %202 = vst [vmem:[%s182 + $0xd8] sm:%s174] %v201
                %v203 = vld [vmem:[%s181 + $0x140] sm:%s174]
                %204 = vst [vmem:[%s182 + $0xf0] sm:%s174] %v203
                %v205 = vld [vmem:[%s181 + $0x160] sm:%s174]
                %206 = vst [vmem:[%s182 + $0x108] sm:%s174] %v205
                %v207 = vld [vmem:[%s181 + $0x180] sm:%s174]
                %208 = vst [vmem:[%s182 + $0x120] sm:%s174] %v207
                %v209 = vld [vmem:[%s181 + $0x1a0] sm:%s174]
                %210 = vst [vmem:[%s182 + $0x138] sm:%s174] %v209
                %v211 = vld [vmem:[%s181 + $0x1c0] sm:%s174]
                %212 = vst [vmem:[%s182 + $0x150] sm:%s174] %v211
                %v213 = vld [vmem:[%s181 + $0x1e0] sm:%s174]
                %214 = vst [vmem:[%s182 + $0x168] sm:%s174] %v213
              $region41: #{tpu_custom_call.1} parent=35 // loop_footer
                %s180 = sadd.s32 1, %s176
              $region42: #{tpu_custom_call.1} parent=35 // loop_footer_branch
                %175 = sbr.rel target = $region38
              $region43: #{tpu_custom_call.1} parent=35 // loop_exit
                _
            $region36: #{tpu_custom_call.1} parent=27 // pred_fallthru
              _
          $region28: #{tpu_custom_call.1} parent=23 // pred_fallthru
            _
          %684 = vnop
        $region24: #{tpu_custom_call.1} parent=19 // pred_fallthru
          _
      $region20: #{tpu_custom_call.1} parent=5 // pred_fallthru
        _
      %p685 = scmp.le.s32.totalorder 1, %s11
      %p686 = scmp.lt.s32.totalorder %s11, 5
      %p687 = pnand %p685, %p686
      %p688 = pneg %p687
      // Predicated region
      $region87: #{tpu_custom_call.1} parent=5 // pred_check
        _
      $region88: #{tpu_custom_call.1} parent=5 // pred_check_branch
        %690 = sbr.rel (%p687) target = $region90
      $region89: #{tpu_custom_call.1} parent=5 // pred_region
        %s691 = ssub.s32 %s11, 1
        %s692 = sand.u32 %s74, 1
        %s693 = sand.u32 %s74, 1
        %s694 = smul.addr %s693, 384
        %s695 = scalar_lea.vmem [#allocation3], %s694
        // Predicated region
        $region91: #{tpu_custom_call.1} parent=89 // pred_check
          %p696 = pneg %p87
        $region92: #{tpu_custom_call.1} parent=89 // pred_check_branch
          %698 = sbr.rel (%p696) target = $region94
        $region93: #{tpu_custom_call.1} parent=89 // pred_region
          _
        $region94: #{tpu_custom_call.1} parent=89 // pred_fallthru
          _
        %p699 = pneg %p51
        %p700 = pneg %p48
        %s701 = sand.u32 %s74, 1
        %s702 = sand.u32 %s74, 1
        %s703 = smul.addr %s702, 384
        %s704 = scalar_lea.vmem [#allocation3], %s703
        %p705 = pneg %p87
        %p706 = pneg %p84
        %p707 = pneg %p119
        %p708 = pneg %p116
        %s709 = sand.u32 %s106, 1
        %s710 = scalar_lea.sflag [#allocation5], %s709
        %s711 = sand.u32 %s106, 1
        %s712 = smul.addr %s711, 48
        %s713 = scalar_lea.vmem [#allocation4], %s712
        %s714 = smul.u32 %s22, 2
        %s715 = sadd.s32 %s714, %s23
        %p716 = scmp.lt.s32.totalorder %s715, 1
        %s717 = scalar_select %p716, %s715, 1
        %s718 = smul.u32 3, %s717
        %s719 = ssub.s32 4, %s718
        %p720 = scmp.lt.s32.totalorder %s719, 3
        %s721 = scalar_select %p720, %s719, 3
        %s722 = smul.u32 2048, %s721
        %s723 = smul.u32 %s22, 2
        %s724 = sadd.s32 %s723, %s23
        %s725 = smul.u32 3, %s724
        %s726 = smul.u32 %s22, 2
        %s727 = sadd.s32 %s726, %s23
        %v728 = vld [vmem:[%s695] sm:$0xff]
        %v729 = vld [vmem:[%s695 + $0x8] sm:$0xff]
        %v730 = vld [vmem:[%s695 + $0x10] sm:$0xff]
        %v731 = vld [vmem:[%s695 + $0x18] sm:$0xff]
        %v732 = vld [vmem:[%s695 + $0x20] sm:$0xff]
        %v733 = vld [vmem:[%s695 + $0x28] sm:$0xff]
        %v734 = vld [vmem:[%s695 + $0x30] sm:$0xff]
        %v735 = vld [vmem:[%s695 + $0x38] sm:$0xff]
        %v736 = vld [vmem:[%s695 + $0x40] sm:$0xff]
        %v737 = vld [vmem:[%s695 + $0x48] sm:$0xff]
        %v738 = vld [vmem:[%s695 + $0x50] sm:$0xff]
        %v739 = vld [vmem:[%s695 + $0x58] sm:$0xff]
        %v740 = vld [vmem:[%s695 + $0x60] sm:$0xff]
        %v741 = vld [vmem:[%s695 + $0x68] sm:$0xff]
        %v742 = vld [vmem:[%s695 + $0x70] sm:$0xff]
        %v743 = vld [vmem:[%s695 + $0x78] sm:$0xff]
        %v744 = vld [vmem:[%s695 + $0x80] sm:$0xff]
        %v745 = vld [vmem:[%s695 + $0x88] sm:$0xff]
        %v746 = vld [vmem:[%s695 + $0x90] sm:$0xff]
        %v747 = vld [vmem:[%s695 + $0x98] sm:$0xff]
        %v748 = vld [vmem:[%s695 + $0xa0] sm:$0xff]
        %v749 = vld [vmem:[%s695 + $0xa8] sm:$0xff]
        %v750 = vld [vmem:[%s695 + $0xb0] sm:$0xff]
        %v751 = vld [vmem:[%s695 + $0xb8] sm:$0xff]
        %v752 = vld [vmem:[%s695 + $0xc0] sm:$0xff]
        %v753 = vld [vmem:[%s695 + $0xc8] sm:$0xff]
        %v754 = vld [vmem:[%s695 + $0xd0] sm:$0xff]
        %v755 = vld [vmem:[%s695 + $0xd8] sm:$0xff]
        %v756 = vld [vmem:[%s695 + $0xe0] sm:$0xff]
        %v757 = vld [vmem:[%s695 + $0xe8] sm:$0xff]
        %v758 = vld [vmem:[%s695 + $0xf0] sm:$0xff]
        %v759 = vld [vmem:[%s695 + $0xf8] sm:$0xff]
        %v760 = vld [vmem:[%s695 + $0x100] sm:$0xff]
        %v761 = vld [vmem:[%s695 + $0x108] sm:$0xff]
        %v762 = vld [vmem:[%s695 + $0x110] sm:$0xff]
        %v763 = vld [vmem:[%s695 + $0x118] sm:$0xff]
        %v764 = vld [vmem:[%s695 + $0x120] sm:$0xff]
        %v765 = vld [vmem:[%s695 + $0x128] sm:$0xff]
        %v766 = vld [vmem:[%s695 + $0x130] sm:$0xff]
        %v767 = vld [vmem:[%s695 + $0x138] sm:$0xff]
        %v768 = vld [vmem:[%s695 + $0x140] sm:$0xff]
        %v769 = vld [vmem:[%s695 + $0x148] sm:$0xff]
        %v770 = vld [vmem:[%s695 + $0x150] sm:$0xff]
        %v771 = vld [vmem:[%s695 + $0x158] sm:$0xff]
        %v772 = vld [vmem:[%s695 + $0x160] sm:$0xff]
        %v773 = vld [vmem:[%s695 + $0x168] sm:$0xff]
        %v774 = vld [vmem:[%s695 + $0x170] sm:$0xff]
        %v775 = vld [vmem:[%s695 + $0x178] sm:$0xff]
        %s776 = smul.u32 %s727, 384
        %v777 = vlaneseq
        %v778 = vand.u32 %v777, 127
        %v779 = vadd.s32 %v778, 128
        %v780 = vadd.s32 %v778, 256
        %v781 = vstv %s776
        %v782 = vadd.s32 %v781, %v778
        %v783 = vadd.s32 %v781, %v779
        %v784 = vadd.s32 %v781, %v780
        %vm785 = vcmp.lt.s32.totalorder %v782, 400
        %vm786 = vcmp.lt.s32.totalorder %v783, 400
        %vm787 = vcmp.lt.s32.totalorder %v784, 400
        %v788 = vsel %vm785, %v728, 0.0
        %v789 = vsel %vm786, %v729, 0.0
        %v790 = vsel %vm787, %v730, 0.0
        %v791 = vsel %vm785, %v731, 0.0
        %v792 = vsel %vm786, %v732, 0.0
        %v793 = vsel %vm787, %v733, 0.0
        %v794 = vsel %vm785, %v734, 0.0
        %v795 = vsel %vm786, %v735, 0.0
        %v796 = vsel %vm787, %v736, 0.0
        %v797 = vsel %vm785, %v737, 0.0
        %v798 = vsel %vm786, %v738, 0.0
        %v799 = vsel %vm787, %v739, 0.0
        %v800 = vsel %vm785, %v740, 0.0
        %v801 = vsel %vm786, %v741, 0.0
        %v802 = vsel %vm787, %v742, 0.0
        %v803 = vsel %vm785, %v743, 0.0
        %v804 = vsel %vm786, %v744, 0.0
        %v805 = vsel %vm787, %v745, 0.0
        %v806 = vsel %vm785, %v746, 0.0
        %v807 = vsel %vm786, %v747, 0.0
        %v808 = vsel %vm787, %v748, 0.0
        %v809 = vsel %vm785, %v749, 0.0
        %v810 = vsel %vm786, %v750, 0.0
        %v811 = vsel %vm787, %v751, 0.0
        %v812 = vsel %vm785, %v752, 0.0
        %v813 = vsel %vm786, %v753, 0.0
        %v814 = vsel %vm787, %v754, 0.0
        %v815 = vsel %vm785, %v755, 0.0
        %v816 = vsel %vm786, %v756, 0.0
        %v817 = vsel %vm787, %v757, 0.0
        %v818 = vsel %vm785, %v758, 0.0
        %v819 = vsel %vm786, %v759, 0.0
        %v820 = vsel %vm787, %v760, 0.0
        %v821 = vsel %vm785, %v761, 0.0
        %v822 = vsel %vm786, %v762, 0.0
        %v823 = vsel %vm787, %v763, 0.0
        %v824 = vsel %vm785, %v764, 0.0
        %v825 = vsel %vm786, %v765, 0.0
        %v826 = vsel %vm787, %v766, 0.0
        %v827 = vsel %vm785, %v767, 0.0
        %v828 = vsel %vm786, %v768, 0.0
        %v829 = vsel %vm787, %v769, 0.0
        %v830 = vsel %vm785, %v770, 0.0
        %v831 = vsel %vm786, %v771, 0.0
        %v832 = vsel %vm787, %v772, 0.0
        %v833 = vsel %vm785, %v773, 0.0
        %v834 = vsel %vm786, %v774, 0.0
        %v835 = vsel %vm787, %v775, 0.0
        %v836 = vld [vmem:[%s0] sm:$0xff]
        %v837 = vld [vmem:[%s0 + $0x8] sm:$0xff]
        %v838 = vld [vmem:[%s0 + $0x10] sm:$0xff]
        %v839 = vld [vmem:[%s0 + $0x18] sm:$0xff]
        %840 = vmatprep.subr.mxu0 %v834
        %841 = vmatpush1.msra.mxu0 %v833
        %842 = vmatprep.subr.mxu0 %v831
        %843 = vmatpush1.msra.mxu0 %v830
        %844 = vmatprep.subr.mxu0 %v828
        %845 = vmatpush1.msra.mxu0 %v827
        %846 = vmatprep.subr.mxu0 %v825
        %847 = vmatpush1.msra.mxu0 %v824
        %848 = vmatprep.subr.mxu0 %v822
        %849 = vmatpush1.msra.mxu0 %v821
        %850 = vmatprep.subr.mxu0 %v819
        %851 = vmatpush1.msra.mxu0 %v818
        %852 = vmatprep.subr.mxu0 %v816
        %853 = vmatpush1.msra.mxu0 %v815
        %854 = vmatprep.subr.mxu0 %v813
        %855 = vmatpush1.msra.mxu0 %v812
        %856 = vmatprep.subr.mxu0 %v810
        %857 = vmatpush1.msra.mxu0 %v809
        %858 = vmatprep.subr.mxu0 %v807
        %859 = vmatpush1.msra.mxu0 %v806
        %860 = vmatprep.subr.mxu0 %v804
        %861 = vmatpush1.msra.mxu0 %v803
        %862 = vmatprep.subr.mxu0 %v801
        %863 = vmatpush1.msra.mxu0 %v800
        %864 = vmatprep.subr.mxu0 %v798
        %865 = vmatpush1.msra.mxu0 %v797
        %866 = vmatprep.subr.mxu0 %v795
        %867 = vmatpush1.msra.mxu0 %v794
        %868 = vmatprep.subr.mxu0 %v792
        %869 = vmatpush1.msra.mxu0 %v791
        %870 = vmatprep.subr.mxu0 %v789
        %871 = vmatpush1.msra.mxu0 %v788
        %872 = vmatprep.subr.mxu0 0.0
        %873 = vmatpush2.msra.mxu0 0.0
        %874 = vmatprep.subr.mxu0 0.0
        %875 = vmatpush2.msra.mxu0 0.0
        %876 = vmatprep.subr.mxu0 0.0
        %877 = vmatpush2.msra.mxu0 0.0
        %878 = vmatprep.subr.mxu0 0.0
        %879 = vmatpush2.msra.mxu0 0.0
        %880 = vmatprep.subr.mxu0 0.0
        %881 = vmatpush2.msra.mxu0 0.0
        %882 = vmatprep.subr.mxu0 0.0
        %883 = vmatpush2.msra.mxu0 0.0
        %884 = vmatprep.subr.mxu0 0.0
        %885 = vmatpush2.msra.mxu0 0.0
        %886 = vmatprep.subr.mxu0 0.0
        %887 = vmatpush2.msra.mxu0 0.0
        %888 = vmatprep.subr.mxu0 0.0
        %889 = vmatpush2.msra.mxu0 0.0
        %890 = vmatprep.subr.mxu0 0.0
        %891 = vmatpush2.msra.mxu0 0.0
        %892 = vmatprep.subr.mxu0 0.0
        %893 = vmatpush2.msra.mxu0 0.0
        %894 = vmatprep.subr.mxu0 0.0
        %895 = vmatpush2.msra.mxu0 0.0
        %896 = vmatprep.subr.mxu0 0.0
        %897 = vmatpush2.msra.mxu0 0.0
        %898 = vmatprep.subr.mxu0 0.0
        %899 = vmatpush2.msra.mxu0 0.0
        %900 = vmatprep.subr.mxu0 0.0
        %901 = vmatpush2.msra.mxu0 0.0
        %902 = vmatprep.subr.mxu0 0.0
        %903 = vmatpush2.msra.mxu0 0.0
        %904 = vmatprep.mubr.f32.mxu0 0.0
        %905 = vmatmul.mubr.f32.gmra.mxu0 %v836
        %v906 = vpop.f32.mrf.mxu0
        %v907 = vadd.f32 0.0, %v906
        %v908 = vpop.f32.mrf.mxu0
        %v909 = vadd.f32 0.0, %v908
        %910 = vmatprep.mubr.f32.mxu0 0.0
        %911 = vmatmul.mubr.f32.gmra.mxu0 %v837
        %v912 = vpop.f32.mrf.mxu0
        %v913 = vadd.f32 0.0, %v912
        %v914 = vpop.f32.mrf.mxu0
        %v915 = vadd.f32 0.0, %v914
        %916 = vmatprep.mubr.f32.mxu0 0.0
        %917 = vmatmul.mubr.f32.gmra.mxu0 %v838
        %v918 = vpop.f32.mrf.mxu0
        %v919 = vadd.f32 0.0, %v918
        %v920 = vpop.f32.mrf.mxu0
        %v921 = vadd.f32 0.0, %v920
        %922 = vmatprep.mubr.f32.mxu0 0.0
        %923 = vmatmul.mubr.f32.gmra.mxu0 %v839
        %v924 = vpop.f32.mrf.mxu0
        %v925 = vadd.f32 0.0, %v924
        %v926 = vpop.f32.mrf.mxu0
        %v927 = vadd.f32 0.0, %v926
        %928 = vdwg.mxu0
        %929 = vmatprep.subr.mxu0 0.0
        %930 = vmatpush1.msra.mxu0 %v835
        %931 = vmatprep.subr.mxu0 0.0
        %932 = vmatpush1.msra.mxu0 %v832
        %933 = vmatprep.subr.mxu0 0.0
        %934 = vmatpush1.msra.mxu0 %v829
        %935 = vmatprep.subr.mxu0 0.0
        %936 = vmatpush1.msra.mxu0 %v826
        %937 = vmatprep.subr.mxu0 0.0
        %938 = vmatpush1.msra.mxu0 %v823
        %939 = vmatprep.subr.mxu0 0.0
        %940 = vmatpush1.msra.mxu0 %v820
        %941 = vmatprep.subr.mxu0 0.0
        %942 = vmatpush1.msra.mxu0 %v817
        %943 = vmatprep.subr.mxu0 0.0
        %944 = vmatpush1.msra.mxu0 %v814
        %945 = vmatprep.subr.mxu0 0.0
        %946 = vmatpush1.msra.mxu0 %v811
        %947 = vmatprep.subr.mxu0 0.0
        %948 = vmatpush1.msra.mxu0 %v808
        %949 = vmatprep.subr.mxu0 0.0
        %950 = vmatpush1.msra.mxu0 %v805
        %951 = vmatprep.subr.mxu0 0.0
        %952 = vmatpush1.msra.mxu0 %v802
        %953 = vmatprep.subr.mxu0 0.0
        %954 = vmatpush1.msra.mxu0 %v799
        %955 = vmatprep.subr.mxu0 0.0
        %956 = vmatpush1.msra.mxu0 %v796
        %957 = vmatprep.subr.mxu0 0.0
        %958 = vmatpush1.msra.mxu0 %v793
        %959 = vmatprep.subr.mxu0 0.0
        %960 = vmatpush1.msra.mxu0 %v790
        %961 = vmatprep.subr.mxu0 0.0
        %962 = vmatpush2.msra.mxu0 0.0
        %963 = vmatprep.subr.mxu0 0.0
        %964 = vmatpush2.msra.mxu0 0.0
        %965 = vmatprep.subr.mxu0 0.0
        %966 = vmatpush2.msra.mxu0 0.0
        %967 = vmatprep.subr.mxu0 0.0
        %968 = vmatpush2.msra.mxu0 0.0
        %969 = vmatprep.subr.mxu0 0.0
        %970 = vmatpush2.msra.mxu0 0.0
        %971 = vmatprep.subr.mxu0 0.0
        %972 = vmatpush2.msra.mxu0 0.0
        %973 = vmatprep.subr.mxu0 0.0
        %974 = vmatpush2.msra.mxu0 0.0
        %975 = vmatprep.subr.mxu0 0.0
        %976 = vmatpush2.msra.mxu0 0.0
        %977 = vmatprep.subr.mxu0 0.0
        %978 = vmatpush2.msra.mxu0 0.0
        %979 = vmatprep.subr.mxu0 0.0
        %980 = vmatpush2.msra.mxu0 0.0
        %981 = vmatprep.subr.mxu0 0.0
        %982 = vmatpush2.msra.mxu0 0.0
        %983 = vmatprep.subr.mxu0 0.0
        %984 = vmatpush2.msra.mxu0 0.0
        %985 = vmatprep.subr.mxu0 0.0
        %986 = vmatpush2.msra.mxu0 0.0
        %987 = vmatprep.subr.mxu0 0.0
        %988 = vmatpush2.msra.mxu0 0.0
        %989 = vmatprep.subr.mxu0 0.0
        %990 = vmatpush2.msra.mxu0 0.0
        %991 = vmatprep.subr.mxu0 0.0
        %992 = vmatpush2.msra.mxu0 0.0
        %993 = vmatprep.mubr.f32.mxu0 0.0
        %994 = vmatmul.mubr.f32.gmra.mxu0 %v836
        %v995 = vpop.f32.mrf.mxu0
        %v996 = vadd.f32 0.0, %v995
        %v997 = vpop.f32.mrf.mxu0
        %998 = vmatprep.mubr.f32.mxu0 0.0
        %999 = vmatmul.mubr.f32.gmra.mxu0 %v837
        %v1000 = vpop.f32.mrf.mxu0
        %v1001 = vadd.f32 0.0, %v1000
        %v1002 = vpop.f32.mrf.mxu0
        %1003 = vmatprep.mubr.f32.mxu0 0.0
        %1004 = vmatmul.mubr.f32.gmra.mxu0 %v838
        %v1005 = vpop.f32.mrf.mxu0
        %v1006 = vadd.f32 0.0, %v1005
        %v1007 = vpop.f32.mrf.mxu0
        %1008 = vmatprep.mubr.f32.mxu0 0.0
        %1009 = vmatmul.mubr.f32.gmra.mxu0 %v839
        %v1010 = vpop.f32.mrf.mxu0
        %v1011 = vadd.f32 0.0, %v1010
        %v1012 = vpop.f32.mrf.mxu0
        %1013 = vdwg.mxu0
        %p1014 = scmp.eq.s32.totalorder %s23, 0
        // Predicated region
        $region95: #{tpu_custom_call.1} parent=89 // pred_check
          %p1015 = pneg %p1014
        $region96: #{tpu_custom_call.1} parent=89 // pred_check_branch
          %1017 = sbr.rel (%p1015) target = $region98
        $region97: #{tpu_custom_call.1} parent=89 // pred_region
          %vm1018 = vcmask 7168
          %1019 = vst.msk [vmem:[#allocation2] sm:$0xff] %vm1018, 0.0
          %1020 = vst.msk [vmem:[#allocation2 + $0x8] sm:$0xff] %vm1018, 0.0
        $region98: #{tpu_custom_call.1} parent=89 // pred_fallthru
          _
        %1027 = vrot.lane.b32.xlu0 %v919, 1
        %v1028 = vpop.permute.xlu0 %1027
        %1029 = vrot.lane.b32.xlu0 %v921, 1
        %v1030 = vpop.permute.xlu0 %1029
        %1031 = vrot.lane.b32.xlu0 %v1006, 1
        %v1032 = vpop.permute.xlu0 %1031
        %1033 = vrot.lane.b32.xlu0 %v925, 1
        %v1034 = vpop.permute.xlu0 %1033
        %1035 = vrot.lane.b32.xlu0 %v927, 1
        %v1036 = vpop.permute.xlu0 %1035
        %1037 = vrot.lane.b32.xlu0 %v1011, 1
        %v1038 = vpop.permute.xlu0 %1037
        %vm1039 = vcmask 7168
        %v1040 = vsel %vm1039, %v1028, %v1030
        %v1041 = vsel %vm1039, %v1030, %v1032
        %v1042 = vsel %vm1039, %v1034, %v1036
        %v1043 = vsel %vm1039, %v1036, %v1038
        %v1050 = vsel %vm1039, 0.0, %v1028
        %v1051 = vsel %vm1039, 0.0, %v1034
        %v1052 = vadd.f32 %v907, %v1050
        %v1053 = vadd.f32 %v909, %v1040
        %v1054 = vadd.f32 %v996, %v1041
        %v1055 = vadd.f32 %v913, %v1051
        %v1056 = vadd.f32 %v915, %v1042
        %v1057 = vadd.f32 %v1001, %v1043
        %1058 = vst [vmem:[%s713] sm:$0xff] %v1052
        %1059 = vst [vmem:[%s713 + $0x8] sm:$0xff] %v1053
        %1060 = vst [vmem:[%s713 + $0x10] sm:$0xff] %v1054
        %1061 = vst [vmem:[%s713 + $0x18] sm:$0xff] %v1055
        %1062 = vst [vmem:[%s713 + $0x20] sm:$0xff] %v1056
        %1063 = vst [vmem:[%s713 + $0x28] sm:$0xff] %v1057
        %v1064 = vld [vmem:[#allocation2] sm:$0xff]
        %v1065 = vld [vmem:[#allocation2 + $0x8] sm:$0xff]
        %v1066 = vadd.f32 %v1052, %v1064
        %v1067 = vadd.f32 %v1055, %v1065
        %1068 = vst.msk [vmem:[%s713] sm:$0xff] %vm1039, %v1066
        %1069 = vst.msk [vmem:[%s713 + $0x18] sm:$0xff] %vm1039, %v1067
        %1072 = vst.msk [vmem:[#allocation2] sm:$0xff] %vm1039, %v1032
        %1073 = vst.msk [vmem:[#allocation2 + $0x8] sm:$0xff] %vm1039, %v1038
        %s1074 = sand.u32 %s106, 1
        %s1075 = scalar_lea.sflag [#allocation5], %s1074
        %s1076 = sand.u32 %s106, 1
        %s1077 = smul.addr %s1076, 48
        %s1078 = scalar_lea.vmem [#allocation4], %s1077
        // Predicated region
        $region99: #{tpu_custom_call.1} parent=89 // pred_check
          %p1079 = pneg %p116
        $region100: #{tpu_custom_call.1} parent=89 // pred_check_branch
          %1081 = sbr.rel (%p1079) target = $region102
        $region101: #{tpu_custom_call.1} parent=89 // pred_region
          %s1082 = smul.u32 %s22, 2
          %s1083 = sadd.s32 %s1082, %s23
          %s1084 = smul.u32 3, %s1083
          %s1086 = ssub.s32 768, 768
          %1087 = vsyncadd %s1075, %s1086
          %s1088 = smul.addr %s21, 12
          %s1089 = sadd.s32 %s1084, %s1088
          %s1090 = smul.addr %s1089, 128
          %s1091 = scalar_lea.hbm %s2, %s1090
          %s1092 = sshll.u32 %s1078, 4
          %s1093 = int_to_ptr.vmem [resolvable:$true] %s1092
          %1098 = dma.vmem_to_hbm [thread:$0]  %s1093, 768, %s1091, %s1075, 384, 768, 24
        $region102: #{tpu_custom_call.1} parent=89 // pred_fallthru
          _
      $region90: #{tpu_custom_call.1} parent=5 // pred_fallthru
        _
      %p1099 = scmp.le.s32.totalorder 2, %s11
      // Predicated region
      $region103: #{tpu_custom_call.1} parent=5 // pred_check
        %p1100 = pneg %p1099
      $region104: #{tpu_custom_call.1} parent=5 // pred_check_branch
        %1102 = sbr.rel (%p1100) target = $region106
      $region105: #{tpu_custom_call.1} parent=5 // pred_region
        %s1103 = ssub.s32 %s11, 2
        // Predicated region
        $region107: #{tpu_custom_call.1} parent=105 // pred_check
          %p1104 = pneg %p122
        $region108: #{tpu_custom_call.1} parent=105 // pred_check_branch
          %1106 = sbr.rel (%p1104) target = $region110
        $region109: #{tpu_custom_call.1} parent=105 // pred_region
          %s1107 = sand.u32 %s107, 1
          %s1108 = scalar_lea.sflag [#allocation5], %s1107
          %s1109 = sand.u32 %s107, 1
          %s1110 = smul.addr %s1109, 48
          %s1111 = scalar_lea.vmem [#allocation4], %s1110
          %1112 = dma.done %s1108, 768
        $region110: #{tpu_custom_call.1} parent=105 // pred_fallthru
          _
      $region106: #{tpu_custom_call.1} parent=5 // pred_fallthru
        _
    $region6: #{tpu_custom_call.1} parent=1 // loop_footer
      %s15 = sadd.s32 1, %s11
    $region7: #{tpu_custom_call.1} parent=1 // loop_footer_branch
      %10 = sbr.rel target = $region3
    $region8: #{tpu_custom_call.1} parent=1 // loop_exit
      _
    %1113 = vsyncpa [#allocation5], 1
    %s1114 = scalar_lea.sflag [#allocation5], 1
    %1115 = vsyncpa %s1114, 1

</llo_original>
